<compile_context>
chip_gen: v7x
topology: tpu7x:2x2x1
jax: 0.10.0
libtpu: 0.0.40
codegen_flags: <defaults>
</compile_context>

<pallas_src>
import numpy as np
import jax
import jax.numpy as jnp
from jax import lax
from jax.experimental import pallas as pl
from jax.experimental.pallas import tpu as pltpu


def make_soft_erosion_weight(kernel_size: int) -> np.ndarray:
    """Deterministic kernel, identical to SoftErosion.__init__ (no checkpoint)."""
    r = kernel_size // 2
    y_idx, x_idx = np.meshgrid(
        np.arange(kernel_size, dtype=np.float32),
        np.arange(kernel_size, dtype=np.float32),
        indexing="ij",
    )
    dist = np.sqrt((x_idx - r) ** 2 + (y_idx - r) ** 2)
    kernel = dist.max() - dist
    kernel = kernel / kernel.sum()
    return kernel.astype(np.float32)  # (k, k)


def _toeplitz_bands(weight: np.ndarray, W: int) -> np.ndarray:
    """T[dy] is (W, W) with T[dy][j + dx - r, j] = weight[dy, dx] (in-range taps).

    With xv the *vertically* zero-padded plane of shape (H + 2r, W),
        y = sum_dy  xv[dy:dy+H, :] @ T[dy]
    reproduces F.conv2d (cross-correlation) with 'same' zero padding: the
    horizontal zero padding is absorbed into the band matrix (out-of-range
    taps are dropped), so only a vertical halo has to be materialised.
    """
    K = weight.shape[0]
    r = K // 2
    t = np.zeros((K, W, W), np.float32)
    j = np.arange(W)
    for dy in range(K):
        for dx in range(K):
            src = j + dx - r
            valid = (src >= 0) & (src < W)
            t[dy, src[valid], j[valid]] = weight[dy, dx]
    return t


def _make_soft_erosion_kernel(H, W, K, threshold, iterations):
    r = K // 2
    Hp = H + 2 * r
    n_acc = 3  # independent partial accumulators -> ILP on the add chain

    def conv_from_pad(t_ref, pad_ref):
        # K banded matmuls on the MXU; row-bands come straight from the ref
        # (vector loads), not slices of a live vreg value.
        accs = [jnp.zeros((H, W), jnp.float32) for _ in range(n_acc)]
        for dy in range(K):
            band = pad_ref[dy:dy + H, :]                       # (H, W)
            accs[dy % n_acc] = accs[dy % n_acc] + jnp.dot(
                band, t_ref[dy], preferred_element_type=jnp.float32)
        y = accs[0]
        for a in accs[1:]:
            y = y + a
        return y

    def kernel(x_ref, t_ref, y_ref, pmax_ref, pad_ref):
        # Build the vertically zero-padded tile in VMEM (halo handled in-kernel).
        pad_ref[...] = jnp.zeros((Hp, W), jnp.float32)
        pad_ref[r:r + H, :] = x_ref[...]
        # Fused erosion iterations: x = min(x, conv(x)), plane stays in VMEM.
        for _ in range(iterations - 1):
            pad_ref[r:r + H, :] = jnp.minimum(pad_ref[r:r + H, :],
                                              conv_from_pad(t_ref, pad_ref))
        # Final conv.
        y = conv_from_pad(t_ref, pad_ref)
        y_ref[...] = y
        # Per-(n, c) masked row-max partials (max over elements < threshold);
        # the global max over these tiny partials is done in JAX glue, so y is
        # not re-read from HBM for the reduction.
        below = jnp.where(y >= jnp.float32(threshold), jnp.float32(-jnp.inf), y)
        pmax_ref[...] = jnp.max(below, axis=1, keepdims=True)   # (H, 1)

    return kernel


def _pallas_threshold_normalize(y: jax.Array, denom: jax.Array,
                                threshold: float) -> jax.Array:
    """out = 1.0 where y >= threshold else y / denom   (elementwise)."""
    N, C, H, W = y.shape

    def norm_kernel(denom_ref, y_ref, o_ref):
        d = denom_ref[0, 0]                # scalar from SMEM
        v = y_ref[...]                     # (H, W)
        o_ref[...] = jnp.where(v >= jnp.float32(threshold), jnp.float32(1.0), v / d)

    return pl.pallas_call(
        norm_kernel,
        out_shape=jax.ShapeDtypeStruct((N, C, H, W), jnp.float32),
        grid=(N, C),
        in_specs=[
            pl.BlockSpec(memory_space=pltpu.MemorySpace.SMEM),   # (1,1) scalar
            pl.BlockSpec((None, None, H, W), lambda n, c: (n, c, 0, 0)),
        ],
        out_specs=pl.BlockSpec((None, None, H, W), lambda n, c: (n, c, 0, 0)),
        compiler_params=pltpu.CompilerParams(
            dimension_semantics=("parallel", "parallel"),
            vmem_limit_bytes=32 * 1024 * 1024),
    )(denom, y)


def soft_erosion(x: jax.Array, kernel_size: int = 15, threshold: float = 0.6,
                 iterations: int = 1):
    """JAX/Pallas equivalent of SoftErosion.forward. Returns (x, mask)."""
    x = x.astype(jnp.float32)
    N, C, H, W = x.shape
    K = kernel_size
    r = K // 2
    Hp = H + 2 * r

    weight = make_soft_erosion_weight(K)
    t_mats = jnp.asarray(_toeplitz_bands(weight, W))          # (K, W, W)

    kernel = _make_soft_erosion_kernel(H, W, K, threshold, iterations)

    x_spec = pl.BlockSpec((None, None, H, W), lambda n, c: (n, c, 0, 0))
    t_spec = pl.BlockSpec((K, W, W), lambda n, c: (0, 0, 0))
    plane_out_spec = pl.BlockSpec((None, None, H, W), lambda n, c: (n, c, 0, 0))
    pmax_spec = pl.BlockSpec((None, None, H, 1), lambda n, c: (n, c, 0, 0))
    cparams = pltpu.CompilerParams(
        dimension_semantics=("parallel", "parallel"),
        vmem_limit_bytes=32 * 1024 * 1024)

    y, pmax = pl.pallas_call(
        kernel,
        out_shape=(jax.ShapeDtypeStruct((N, C, H, W), jnp.float32),
                   jax.ShapeDtypeStruct((N, C, H, 1), jnp.float32)),
        grid=(N, C),
        in_specs=[x_spec, t_spec],
        out_specs=(plane_out_spec, pmax_spec),
        scratch_shapes=[pltpu.VMEM((Hp, W), jnp.float32)],     # padded plane
        compiler_params=cparams,
    )(x, t_mats)

    mask = y >= threshold                          # cheap XLA compare on y
    denom = jnp.max(pmax)                          # tiny (N*C*H,) scalar reduce
    out = _pallas_threshold_normalize(y, jnp.reshape(denom, (1, 1)), threshold)
    return out, mask


# ---------------------------------------------------------------------------
# Pure-JAX reference (for correctness check only).
# ---------------------------------------------------------------------------
def _reference_soft_erosion(x, kernel_size=15, threshold=0.6, iterations=1):
    x = x.astype(jnp.float32)
    C = x.shape[1]
    r = kernel_size // 2
    w = jnp.asarray(make_soft_erosion_weight(kernel_size)).reshape(
        1, 1, kernel_size, kernel_size)

    def conv(v):
        return lax.conv_general_dilated(
            v, w, window_strides=(1, 1), padding=((r, r), (r, r)),
            dimension_numbers=("NCHW", "OIHW", "NCHW"),
            feature_group_count=C, precision=lax.Precision.HIGHEST)

    for _ in range(iterations - 1):
        x = jnp.minimum(x, conv(x))
    y = conv(x)
    mask = y >= threshold
    denom = jnp.max(jnp.where(mask, -jnp.inf, y))
    out = jnp.where(mask, 1.0, y / denom)
    return out, mask, y


if __name__ == "__main__":
    key = jax.random.PRNGKey(0)
    # (batch=2, channels=1, 16x16 mask) — groups=C conv with a (1,1,k,k)
    # weight requires C == 1, exactly like the PyTorch module.
    x = jax.random.uniform(key, (2, 1, 16, 16), dtype=jnp.float32)

    se = jax.jit(soft_erosion,
                 static_argnames=("kernel_size", "threshold", "iterations"))

    for iters in (1, 2):   # exercise both the 1-pass and fused-iteration paths
        out, mask = se(x, kernel_size=15, threshold=0.6, iterations=iters)
        out = jax.block_until_ready(out)
        mask = jax.block_until_ready(mask)

        ref_out, ref_mask, ref_y = _reference_soft_erosion(
            x, kernel_size=15, threshold=0.6, iterations=iters)

        # Mask must match except possibly where the conv output sits right on
        # the threshold (MXU f32 rounding may differ from XLA's conv rounding).
        borderline = jnp.abs(ref_y - 0.6) < 5e-3
        assert bool(jnp.all((mask == ref_mask) | borderline)), "mask mismatch"
        agree = mask == ref_mask
        err = jnp.where(agree, jnp.abs(out - ref_out), 0.0)
        assert bool(jnp.all(err < 2e-3)), "output mismatch vs reference"

    print("KERNEL_OK")
</pallas_src>

<mosaic_0001>
module attributes {stable_mosaic.version = 11 : i64} {
  func.func @norm_kernel(%arg0: i32, %arg1: i32, %arg2: memref<1x1xf32, #tpu.memory_space<smem>>, %arg3: memref<1x1x16x16xf32, #tpu.memory_space<vmem>>, %arg4: memref<1x1x16x16xf32, #tpu.memory_space<vmem>>) attributes {dimension_semantics = [#tpu.dimension_semantics<parallel>, #tpu.dimension_semantics<parallel>], iteration_bounds = array<i64: 2, 1>, scalar_prefetch = 0 : i64, scratch_operands = 0 : i64, tpu.core_type = #tpu.core_type<tc>, window_params = [{transform_indices = @transform_0, window_bounds = array<i64: 1, 1>}, {transform_indices = @transform_1, window_bounds = array<i64: 1, 1, 16, 16>}, {transform_indices = @transform_2, window_bounds = array<i64: 1, 1, 16, 16>}]} {
    %c0 = arith.constant 0 : index
    %c0_0 = arith.constant 0 : index
    %0 = memref.load %arg2[%c0, %c0_0] : memref<1x1xf32, #tpu.memory_space<smem>>
    %c0_1 = arith.constant 0 : index
    %c0_2 = arith.constant 0 : index
    %c0_3 = arith.constant 0 : index
    %c0_4 = arith.constant 0 : index
    %1 = vector.load %arg3[%c0_1, %c0_2, %c0_3, %c0_4] : memref<1x1x16x16xf32, #tpu.memory_space<vmem>>, vector<1x1x16x16xf32>
    %2 = vector.shape_cast %1 : vector<1x1x16x16xf32> to vector<16x16xf32>
    %cst = arith.constant 6.000000e-01 : f32
    %3 = vector.broadcast %cst : f32 to vector<16x16xf32>
    %4 = arith.cmpf oge, %2, %3 : vector<16x16xf32>
    %5 = vector.broadcast %0 : f32 to vector<16x16xf32>
    %6 = arith.divf %2, %5 : vector<16x16xf32>
    %cst_5 = arith.constant 1.000000e+00 : f32
    %7 = vector.broadcast %cst_5 : f32 to vector<16x16xf32>
    %8 = arith.select %4, %7, %6 : vector<16x16xi1>, vector<16x16xf32>
    %c0_6 = arith.constant 0 : index
    %c0_7 = arith.constant 0 : index
    %c0_8 = arith.constant 0 : index
    %c0_9 = arith.constant 0 : index
    %9 = vector.load %arg4[%c0_6, %c0_7, %c0_8, %c0_9] : memref<1x1x16x16xf32, #tpu.memory_space<vmem>>, vector<1x1x16x16xf32>
    %10 = vector.shape_cast %9 : vector<1x1x16x16xf32> to vector<16x16xf32>
    %11 = vector.shape_cast %8 : vector<16x16xf32> to vector<1x1x16x16xf32>
    tpu.vector_store %arg4[%c0_6, %c0_7, %c0_8, %c0_9], %11 {strides = array<i32>} : memref<1x1x16x16xf32, #tpu.memory_space<vmem>>, vector<1x1x16x16xf32>,
    return
  }
  func.func @transform_0(%arg0: i32, %arg1: i32) -> (i32, i32) {
    %c0_i32 = arith.constant 0 : i32
    %c0_i32_0 = arith.constant 0 : i32
    %c0_i32_1 = arith.constant 0 : i32
    return %c0_i32, %c0_i32_0 : i32, i32
  }
  func.func @transform_1(%arg0: i32, %arg1: i32) -> (i32, i32, i32, i32) {
    %c0_i32 = arith.constant 0 : i32
    %c0_i32_0 = arith.constant 0 : i32
    %c0_i32_1 = arith.constant 0 : i32
    return %arg0, %arg1, %c0_i32, %c0_i32_0 : i32, i32, i32, i32
  }
  func.func @transform_2(%arg0: i32, %arg1: i32) -> (i32, i32, i32, i32) {
    %c0_i32 = arith.constant 0 : i32
    %c0_i32_0 = arith.constant 0 : i32
    %c0_i32_1 = arith.constant 0 : i32
    return %arg0, %arg1, %c0_i32, %c0_i32_0 : i32, i32, i32, i32
  }
}

module attributes {stable_mosaic.version = 11 : i64} {
  func.func @kernel(%arg0: i32, %arg1: i32, %arg2: memref<1x1x16x16xf32, #tpu.memory_space<vmem>>, %arg3: memref<15x16x16xf32, #tpu.memory_space<vmem>>, %arg4: memref<1x1x16x16xf32, #tpu.memory_space<vmem>>, %arg5: memref<1x1x16x1xf32, #tpu.memory_space<vmem>>, %arg6: memref<30x16xf32, #tpu.memory_space<vmem>>) attributes {dimension_semantics = [#tpu.dimension_semantics<parallel>, #tpu.dimension_semantics<parallel>], iteration_bounds = array<i64: 2, 1>, scalar_prefetch = 0 : i64, scratch_operands = 1 : i64, tpu.core_type = #tpu.core_type<tc>, window_params = [{transform_indices = @transform_0, window_bounds = array<i64: 1, 1, 16, 16>}, {pipeline_mode = #tpu.pipeline_mode<synchronous>, transform_indices = @transform_1, window_bounds = array<i64: 15, 16, 16>}, {transform_indices = @transform_2, window_bounds = array<i64: 1, 1, 16, 16>}, {transform_indices = @transform_3, window_bounds = array<i64: 1, 1, 16, 1>}]} {
    %cst = arith.constant 0.000000e+00 : f32
    %0 = vector.broadcast %cst : f32 to vector<30x16xf32>
    %c0 = arith.constant 0 : index
    %c0_0 = arith.constant 0 : index
    %1 = vector.load %arg6[%c0, %c0_0] : memref<30x16xf32, #tpu.memory_space<vmem>>, vector<30x16xf32>
    tpu.vector_store %arg6[%c0, %c0_0], %0 {strides = array<i32>} : memref<30x16xf32, #tpu.memory_space<vmem>>, vector<30x16xf32>,
    %c0_1 = arith.constant 0 : index
    %c0_2 = arith.constant 0 : index
    %c0_3 = arith.constant 0 : index
    %c0_4 = arith.constant 0 : index
    %2 = vector.load %arg2[%c0_1, %c0_2, %c0_3, %c0_4] : memref<1x1x16x16xf32, #tpu.memory_space<vmem>>, vector<1x1x16x16xf32>
    %3 = vector.shape_cast %2 : vector<1x1x16x16xf32> to vector<16x16xf32>
    %c7 = arith.constant 7 : index
    %c0_5 = arith.constant 0 : index
    %4 = vector.load %arg6[%c7, %c0_5] : memref<30x16xf32, #tpu.memory_space<vmem>>, vector<16x16xf32>
    tpu.vector_store %arg6[%c7, %c0_5], %3 {strides = array<i32>} : memref<30x16xf32, #tpu.memory_space<vmem>>, vector<16x16xf32>,
    %cst_6 = arith.constant 0.000000e+00 : f32
    %5 = vector.broadcast %cst_6 : f32 to vector<16x16xf32>
    %cst_7 = arith.constant 0.000000e+00 : f32
    %6 = vector.broadcast %cst_7 : f32 to vector<16x16xf32>
    %cst_8 = arith.constant 0.000000e+00 : f32
    %7 = vector.broadcast %cst_8 : f32 to vector<16x16xf32>
    %c0_9 = arith.constant 0 : index
    %c0_10 = arith.constant 0 : index
    %8 = vector.load %arg6[%c0_9, %c0_10] : memref<30x16xf32, #tpu.memory_space<vmem>>, vector<16x16xf32>
    %c0_11 = arith.constant 0 : index
    %c0_12 = arith.constant 0 : index
    %c0_13 = arith.constant 0 : index
    %9 = vector.load %arg3[%c0_11, %c0_12, %c0_13] : memref<15x16x16xf32, #tpu.memory_space<vmem>>, vector<1x16x16xf32>
    %10 = vector.shape_cast %9 : vector<1x16x16xf32> to vector<16x16xf32>
    %cst_14 = arith.constant dense<0.000000e+00> : vector<16x16xf32>
    %11 = tpu.matmul %8, %10, %cst_14 {dimension_numbers = #tpu.dot_dimension_numbers<[1], [0], [0], [1], [0, 0, 1, 1], [], []>} : vector<16x16xf32>, vector<16x16xf32>, vector<16x16xf32> -> vector<16x16xf32>
    %12 = arith.addf %5, %11 : vector<16x16xf32>
    %c1 = arith.constant 1 : index
    %c0_15 = arith.constant 0 : index
    %13 = vector.load %arg6[%c1, %c0_15] : memref<30x16xf32, #tpu.memory_space<vmem>>, vector<16x16xf32>
    %c1_16 = arith.constant 1 : index
    %c0_17 = arith.constant 0 : index
    %c0_18 = arith.constant 0 : index
    %14 = vector.load %arg3[%c1_16, %c0_17, %c0_18] : memref<15x16x16xf32, #tpu.memory_space<vmem>>, vector<1x16x16xf32>
    %15 = vector.shape_cast %14 : vector<1x16x16xf32> to vector<16x16xf32>
    %cst_19 = arith.constant dense<0.000000e+00> : vector<16x16xf32>
    %16 = tpu.matmul %13, %15, %cst_19 {dimension_numbers = #tpu.dot_dimension_numbers<[1], [0], [0], [1], [0, 0, 1, 1], [], []>} : vector<16x16xf32>, vector<16x16xf32>, vector<16x16xf32> -> vector<16x16xf32>
    %17 = arith.addf %6, %16 : vector<16x16xf32>
    %c2 = arith.constant 2 : index
    %c0_20 = arith.constant 0 : index
    %18 = vector.load %arg6[%c2, %c0_20] : memref<30x16xf32, #tpu.memory_space<vmem>>, vector<16x16xf32>
    %c2_21 = arith.constant 2 : index
    %c0_22 = arith.constant 0 : index
    %c0_23 = arith.constant 0 : index
    %19 = vector.load %arg3[%c2_21, %c0_22, %c0_23] : memref<15x16x16xf32, #tpu.memory_space<vmem>>, vector<1x16x16xf32>
    %20 = vector.shape_cast %19 : vector<1x16x16xf32> to vector<16x16xf32>
    %cst_24 = arith.constant dense<0.000000e+00> : vector<16x16xf32>
    %21 = tpu.matmul %18, %20, %cst_24 {dimension_numbers = #tpu.dot_dimension_numbers<[1], [0], [0], [1], [0, 0, 1, 1], [], []>} : vector<16x16xf32>, vector<16x16xf32>, vector<16x16xf32> -> vector<16x16xf32>
    %22 = arith.addf %7, %21 : vector<16x16xf32>
    %c3 = arith.constant 3 : index
    %c0_25 = arith.constant 0 : index
    %23 = vector.load %arg6[%c3, %c0_25] : memref<30x16xf32, #tpu.memory_space<vmem>>, vector<16x16xf32>
    %c3_26 = arith.constant 3 : index
    %c0_27 = arith.constant 0 : index
    %c0_28 = arith.constant 0 : index
    %24 = vector.load %arg3[%c3_26, %c0_27, %c0_28] : memref<15x16x16xf32, #tpu.memory_space<vmem>>, vector<1x16x16xf32>
    %25 = vector.shape_cast %24 : vector<1x16x16xf32> to vector<16x16xf32>
    %cst_29 = arith.constant dense<0.000000e+00> : vector<16x16xf32>
    %26 = tpu.matmul %23, %25, %cst_29 {dimension_numbers = #tpu.dot_dimension_numbers<[1], [0], [0], [1], [0, 0, 1, 1], [], []>} : vector<16x16xf32>, vector<16x16xf32>, vector<16x16xf32> -> vector<16x16xf32>
    %27 = arith.addf %12, %26 : vector<16x16xf32>
    %c4 = arith.constant 4 : index
    %c0_30 = arith.constant 0 : index
    %28 = vector.load %arg6[%c4, %c0_30] : memref<30x16xf32, #tpu.memory_space<vmem>>, vector<16x16xf32>
    %c4_31 = arith.constant 4 : index
    %c0_32 = arith.constant 0 : index
    %c0_33 = arith.constant 0 : index
    %29 = vector.load %arg3[%c4_31, %c0_32, %c0_33] : memref<15x16x16xf32, #tpu.memory_space<vmem>>, vector<1x16x16xf32>
    %30 = vector.shape_cast %29 : vector<1x16x16xf32> to vector<16x16xf32>
    %cst_34 = arith.constant dense<0.000000e+00> : vector<16x16xf32>
    %31 = tpu.matmul %28, %30, %cst_34 {dimension_numbers = #tpu.dot_dimension_numbers<[1], [0], [0], [1], [0, 0, 1, 1], [], []>} : vector<16x16xf32>, vector<16x16xf32>, vector<16x16xf32> -> vector<16x16xf32>
    %32 = arith.addf %17, %31 : vector<16x16xf32>
    %c5 = arith.constant 5 : index
    %c0_35 = arith.constant 0 : index
    %33 = vector.load %arg6[%c5, %c0_35] : memref<30x16xf32, #tpu.memory_space<vmem>>, vector<16x16xf32>
    %c5_36 = arith.constant 5 : index
    %c0_37 = arith.constant 0 : index
    %c0_38 = arith.constant 0 : index
    %34 = vector.load %arg3[%c5_36, %c0_37, %c0_38] : memref<15x16x16xf32, #tpu.memory_space<vmem>>, vector<1x16x16xf32>
    %35 = vector.shape_cast %34 : vector<1x16x16xf32> to vector<16x16xf32>
    %cst_39 = arith.constant dense<0.000000e+00> : vector<16x16xf32>
    %36 = tpu.matmul %33, %35, %cst_39 {dimension_numbers = #tpu.dot_dimension_numbers<[1], [0], [0], [1], [0, 0, 1, 1], [], []>} : vector<16x16xf32>, vector<16x16xf32>, vector<16x16xf32> -> vector<16x16xf32>
    %37 = arith.addf %22, %36 : vector<16x16xf32>
    %c6 = arith.constant 6 : index
    %c0_40 = arith.constant 0 : index
    %38 = vector.load %arg6[%c6, %c0_40] : memref<30x16xf32, #tpu.memory_space<vmem>>, vector<16x16xf32>
    %c6_41 = arith.constant 6 : index
    %c0_42 = arith.constant 0 : index
    %c0_43 = arith.constant 0 : index
    %39 = vector.load %arg3[%c6_41, %c0_42, %c0_43] : memref<15x16x16xf32, #tpu.memory_space<vmem>>, vector<1x16x16xf32>
    %40 = vector.shape_cast %39 : vector<1x16x16xf32> to vector<16x16xf32>
    %cst_44 = arith.constant dense<0.000000e+00> : vector<16x16xf32>
    %41 = tpu.matmul %38, %40, %cst_44 {dimension_numbers = #tpu.dot_dimension_numbers<[1], [0], [0], [1], [0, 0, 1, 1], [], []>} : vector<16x16xf32>, vector<16x16xf32>, vector<16x16xf32> -> vector<16x16xf32>
    %42 = arith.addf %27, %41 : vector<16x16xf32>
    %c7_45 = arith.constant 7 : index
    %c0_46 = arith.constant 0 : index
    %43 = vector.load %arg6[%c7_45, %c0_46] : memref<30x16xf32, #tpu.memory_space<vmem>>, vector<16x16xf32>
    %c7_47 = arith.constant 7 : index
    %c0_48 = arith.constant 0 : index
    %c0_49 = arith.constant 0 : index
    %44 = vector.load %arg3[%c7_47, %c0_48, %c0_49] : memref<15x16x16xf32, #tpu.memory_space<vmem>>, vector<1x16x16xf32>
    %45 = vector.shape_cast %44 : vector<1x16x16xf32> to vector<16x16xf32>
    %cst_50 = arith.constant dense<0.000000e+00> : vector<16x16xf32>
    %46 = tpu.matmul %43, %45, %cst_50 {dimension_numbers = #tpu.dot_dimension_numbers<[1], [0], [0], [1], [0, 0, 1, 1], [], []>} : vector<16x16xf32>, vector<16x16xf32>, vector<16x16xf32> -> vector<16x16xf32>
    %47 = arith.addf %32, %46 : vector<16x16xf32>
    %c8 = arith.constant 8 : index
    %c0_51 = arith.constant 0 : index
    %48 = vector.load %arg6[%c8, %c0_51] : memref<30x16xf32, #tpu.memory_space<vmem>>, vector<16x16xf32>
    %c8_52 = arith.constant 8 : index
    %c0_53 = arith.constant 0 : index
    %c0_54 = arith.constant 0 : index
    %49 = vector.load %arg3[%c8_52, %c0_53, %c0_54] : memref<15x16x16xf32, #tpu.memory_space<vmem>>, vector<1x16x16xf32>
    %50 = vector.shape_cast %49 : vector<1x16x16xf32> to vector<16x16xf32>
    %cst_55 = arith.constant dense<0.000000e+00> : vector<16x16xf32>
    %51 = tpu.matmul %48, %50, %cst_55 {dimension_numbers = #tpu.dot_dimension_numbers<[1], [0], [0], [1], [0, 0, 1, 1], [], []>} : vector<16x16xf32>, vector<16x16xf32>, vector<16x16xf32> -> vector<16x16xf32>
    %52 = arith.addf %37, %51 : vector<16x16xf32>
    %c9 = arith.constant 9 : index
    %c0_56 = arith.constant 0 : index
    %53 = vector.load %arg6[%c9, %c0_56] : memref<30x16xf32, #tpu.memory_space<vmem>>, vector<16x16xf32>
    %c9_57 = arith.constant 9 : index
    %c0_58 = arith.constant 0 : index
    %c0_59 = arith.constant 0 : index
    %54 = vector.load %arg3[%c9_57, %c0_58, %c0_59] : memref<15x16x16xf32, #tpu.memory_space<vmem>>, vector<1x16x16xf32>
    %55 = vector.shape_cast %54 : vector<1x16x16xf32> to vector<16x16xf32>
    %cst_60 = arith.constant dense<0.000000e+00> : vector<16x16xf32>
    %56 = tpu.matmul %53, %55, %cst_60 {dimension_numbers = #tpu.dot_dimension_numbers<[1], [0], [0], [1], [0, 0, 1, 1], [], []>} : vector<16x16xf32>, vector<16x16xf32>, vector<16x16xf32> -> vector<16x16xf32>
    %57 = arith.addf %42, %56 : vector<16x16xf32>
    %c10 = arith.constant 10 : index
    %c0_61 = arith.constant 0 : index
    %58 = vector.load %arg6[%c10, %c0_61] : memref<30x16xf32, #tpu.memory_space<vmem>>, vector<16x16xf32>
    %c10_62 = arith.constant 10 : index
    %c0_63 = arith.constant 0 : index
    %c0_64 = arith.constant 0 : index
    %59 = vector.load %arg3[%c10_62, %c0_63, %c0_64] : memref<15x16x16xf32, #tpu.memory_space<vmem>>, vector<1x16x16xf32>
    %60 = vector.shape_cast %59 : vector<1x16x16xf32> to vector<16x16xf32>
    %cst_65 = arith.constant dense<0.000000e+00> : vector<16x16xf32>
    %61 = tpu.matmul %58, %60, %cst_65 {dimension_numbers = #tpu.dot_dimension_numbers<[1], [0], [0], [1], [0, 0, 1, 1], [], []>} : vector<16x16xf32>, vector<16x16xf32>, vector<16x16xf32> -> vector<16x16xf32>
    %62 = arith.addf %47, %61 : vector<16x16xf32>
    %c11 = arith.constant 11 : index
    %c0_66 = arith.constant 0 : index
    %63 = vector.load %arg6[%c11, %c0_66] : memref<30x16xf32, #tpu.memory_space<vmem>>, vector<16x16xf32>
    %c11_67 = arith.constant 11 : index
    %c0_68 = arith.constant 0 : index
    %c0_69 = arith.constant 0 : index
    %64 = vector.load %arg3[%c11_67, %c0_68, %c0_69] : memref<15x16x16xf32, #tpu.memory_space<vmem>>, vector<1x16x16xf32>
    %65 = vector.shape_cast %64 : vector<1x16x16xf32> to vector<16x16xf32>
    %cst_70 = arith.constant dense<0.000000e+00> : vector<16x16xf32>
    %66 = tpu.matmul %63, %65, %cst_70 {dimension_numbers = #tpu.dot_dimension_numbers<[1], [0], [0], [1], [0, 0, 1, 1], [], []>} : vector<16x16xf32>, vector<16x16xf32>, vector<16x16xf32> -> vector<16x16xf32>
    %67 = arith.addf %52, %66 : vector<16x16xf32>
    %c12 = arith.constant 12 : index
    %c0_71 = arith.constant 0 : index
    %68 = vector.load %arg6[%c12, %c0_71] : memref<30x16xf32, #tpu.memory_space<vmem>>, vector<16x16xf32>
    %c12_72 = arith.constant 12 : index
    %c0_73 = arith.constant 0 : index
    %c0_74 = arith.constant 0 : index
    %69 = vector.load %arg3[%c12_72, %c0_73, %c0_74] : memref<15x16x16xf32, #tpu.memory_space<vmem>>, vector<1x16x16xf32>
    %70 = vector.shape_cast %69 : vector<1x16x16xf32> to vector<16x16xf32>
    %cst_75 = arith.constant dense<0.000000e+00> : vector<16x16xf32>
    %71 = tpu.matmul %68, %70, %cst_75 {dimension_numbers = #tpu.dot_dimension_numbers<[1], [0], [0], [1], [0, 0, 1, 1], [], []>} : vector<16x16xf32>, vector<16x16xf32>, vector<16x16xf32> -> vector<16x16xf32>
    %72 = arith.addf %57, %71 : vector<16x16xf32>
    %c13 = arith.constant 13 : index
    %c0_76 = arith.constant 0 : index
    %73 = vector.load %arg6[%c13, %c0_76] : memref<30x16xf32, #tpu.memory_space<vmem>>, vector<16x16xf32>
    %c13_77 = arith.constant 13 : index
    %c0_78 = arith.constant 0 : index
    %c0_79 = arith.constant 0 : index
    %74 = vector.load %arg3[%c13_77, %c0_78, %c0_79] : memref<15x16x16xf32, #tpu.memory_space<vmem>>, vector<1x16x16xf32>
    %75 = vector.shape_cast %74 : vector<1x16x16xf32> to vector<16x16xf32>
    %cst_80 = arith.constant dense<0.000000e+00> : vector<16x16xf32>
    %76 = tpu.matmul %73, %75, %cst_80 {dimension_numbers = #tpu.dot_dimension_numbers<[1], [0], [0], [1], [0, 0, 1, 1], [], []>} : vector<16x16xf32>, vector<16x16xf32>, vector<16x16xf32> -> vector<16x16xf32>
    %77 = arith.addf %62, %76 : vector<16x16xf32>
    %c14 = arith.constant 14 : index
    %c0_81 = arith.constant 0 : index
    %78 = vector.load %arg6[%c14, %c0_81] : memref<30x16xf32, #tpu.memory_space<vmem>>, vector<16x16xf32>
    %c14_82 = arith.constant 14 : index
    %c0_83 = arith.constant 0 : index
    %c0_84 = arith.constant 0 : index
    %79 = vector.load %arg3[%c14_82, %c0_83, %c0_84] : memref<15x16x16xf32, #tpu.memory_space<vmem>>, vector<1x16x16xf32>
    %80 = vector.shape_cast %79 : vector<1x16x16xf32> to vector<16x16xf32>
    %cst_85 = arith.constant dense<0.000000e+00> : vector<16x16xf32>
    %81 = tpu.matmul %78, %80, %cst_85 {dimension_numbers = #tpu.dot_dimension_numbers<[1], [0], [0], [1], [0, 0, 1, 1], [], []>} : vector<16x16xf32>, vector<16x16xf32>, vector<16x16xf32> -> vector<16x16xf32>
    %82 = arith.addf %67, %81 : vector<16x16xf32>
    %83 = arith.addf %72, %77 : vector<16x16xf32>
    %84 = arith.addf %83, %82 : vector<16x16xf32>
    %c0_86 = arith.constant 0 : index
    %c0_87 = arith.constant 0 : index
    %c0_88 = arith.constant 0 : index
    %c0_89 = arith.constant 0 : index
    %85 = vector.load %arg4[%c0_86, %c0_87, %c0_88, %c0_89] : memref<1x1x16x16xf32, #tpu.memory_space<vmem>>, vector<1x1x16x16xf32>
    %86 = vector.shape_cast %85 : vector<1x1x16x16xf32> to vector<16x16xf32>
    %87 = vector.shape_cast %84 : vector<16x16xf32> to vector<1x1x16x16xf32>
    tpu.vector_store %arg4[%c0_86, %c0_87, %c0_88, %c0_89], %87 {strides = array<i32>} : memref<1x1x16x16xf32, #tpu.memory_space<vmem>>, vector<1x1x16x16xf32>,
    %cst_90 = arith.constant 6.000000e-01 : f32
    %88 = vector.broadcast %cst_90 : f32 to vector<16x16xf32>
    %89 = arith.cmpf oge, %84, %88 : vector<16x16xf32>
    %cst_91 = arith.constant 0xFF800000 : f32
    %90 = vector.broadcast %cst_91 : f32 to vector<16x16xf32>
    %91 = arith.select %89, %90, %84 : vector<16x16xi1>, vector<16x16xf32>
    %cst_92 = arith.constant dense<0xFF800000> : vector<16xf32>
    %92 = vector.multi_reduction <maximumf>, %91, %cst_92 [1] : vector<16x16xf32> to vector<16xf32>
    %93 = vector.shape_cast %92 : vector<16xf32> to vector<16x1xf32>
    %c0_93 = arith.constant 0 : index
    %c0_94 = arith.constant 0 : index
    %c0_95 = arith.constant 0 : index
    %c0_96 = arith.constant 0 : index
    %94 = vector.load %arg5[%c0_93, %c0_94, %c0_95, %c0_96] : memref<1x1x16x1xf32, #tpu.memory_space<vmem>>, vector<1x1x16x1xf32>
    %95 = vector.shape_cast %94 : vector<1x1x16x1xf32> to vector<16x1xf32>
    %96 = vector.shape_cast %93 : vector<16x1xf32> to vector<1x1x16x1xf32>
    tpu.vector_store %arg5[%c0_93, %c0_94, %c0_95, %c0_96], %96 {strides = array<i32>} : memref<1x1x16x1xf32, #tpu.memory_space<vmem>>, vector<1x1x16x1xf32>,
    return
  }
  func.func @transform_0(%arg0: i32, %arg1: i32) -> (i32, i32, i32, i32) {
    %c0_i32 = arith.constant 0 : i32
    %c0_i32_0 = arith.constant 0 : i32
    %c0_i32_1 = arith.constant 0 : i32
    return %arg0, %arg1, %c0_i32, %c0_i32_0 : i32, i32, i32, i32
  }
  func.func @transform_1(%arg0: i32, %arg1: i32) -> (i32, i32, i32) {
    %c0_i32 = arith.constant 0 : i32
    %c0_i32_0 = arith.constant 0 : i32
    %c0_i32_1 = arith.constant 0 : i32
    %c0_i32_2 = arith.constant 0 : i32
    return %c0_i32, %c0_i32_0, %c0_i32_1 : i32, i32, i32
  }
  func.func @transform_2(%arg0: i32, %arg1: i32) -> (i32, i32, i32, i32) {
    %c0_i32 = arith.constant 0 : i32
    %c0_i32_0 = arith.constant 0 : i32
    %c0_i32_1 = arith.constant 0 : i32
    return %arg0, %arg1, %c0_i32, %c0_i32_0 : i32, i32, i32, i32
  }
  func.func @transform_3(%arg0: i32, %arg1: i32) -> (i32, i32, i32, i32) {
    %c0_i32 = arith.constant 0 : i32
    %c0_i32_0 = arith.constant 0 : i32
    %c0_i32_1 = arith.constant 0 : i32
    return %arg0, %arg1, %c0_i32, %c0_i32_0 : i32, i32, i32, i32
  }
}

</mosaic_0001>

<llo_original>
// kernel: soft_erosion.3
$region0: #{soft_erosion.3}
  #allocation0 [shape = 'u32[]', space=smem, size = 0x4, offset = 0x4, fixed_abs, tag = 'smem constant byte address 0x4 - core index']
  #allocation1 [shape = 'u32[144,128]{1,0:T(1,128)}', space=vmem, size = 0x12000, scoped, tag = 'internal scratch']
  #allocation2 [shape = 'f32[1,1]{1,0:T(1,128)S(6)}', space=smem, size = 0x200, scoped, tag = 'scoped memory for soft_erosion.3']
  %s0 = inlined_call_operand.<no memory space> [shape: f32[1,1], index: 0, kind: input, shape index: {}]
  %s1 = inlined_call_operand.vmem [shape: f32[2,1,16,16], index: 1, kind: input, shape index: {}]
  %s2 = inlined_call_operand.hbm [shape: f32[2,1,16,16], index: 2, kind: output, shape index: {}]
  %s3 = sld [smem:[#allocation0]]
  $region41: #{soft_erosion.3} parent=0
    _
  %s5 = ssub.s32 1, %s3
  %s6 = scalar_select 0, %s5, %s3
  %7 = sst [smem:[#allocation2]] %s0
  $region1: #{soft_erosion.3} parent=0
    #allocation3 [shape = 'u8[16384]{0}', space=vmem, size = 0x4000, scoped, tag = 'output window, operand 0']
    #allocation4 [shape = 's32[2]{0}', space=sflag, size = 0x8, scoped, tag = 'scoped memory for soft_erosion.3']
    %8 = vsyncpa [#allocation4], 0
    %s9 = scalar_lea.sflag [#allocation4], 1
    %10 = vsyncpa %s9, 0
    loop: start=0, step=1, limit=4
    $region2: #{soft_erosion.3} parent=1 // loop_pre_header
      _
    $region3: #{soft_erosion.3} parent=1 // loop_header
      %s12 = sphi 0, %s16
      %p13 = scmp.ge.s32.totalorder %s12, 4
      %s19 = sphi 0, %s31
      %s20 = sphi 0, %s27
      %s21 = sphi 0, %s19
      %s22 = sphi 0, %s20
      %s23 = sphi 0, %s21
      %s24 = sphi 0, %s22
      %s32 = sphi 0, %s32
      %s34 = sphi 0, %s32
      %s35 = sphi 0, %s34
      %s49 = sphi 0, %s35
      %s57 = sphi 0, %s59
      %s60 = sphi 0, %s57
      %s61 = sphi 0, %s60
      %s77 = sphi 0, %s61
      %s85 = sphi 0, %s87
      %s88 = sphi 0, %s85
      %s89 = sphi 0, %s88
      %s105 = sphi 0, %s89
    $region4: #{soft_erosion.3} parent=1 // loop_header_branch
      %15 = sbr.rel (%p13) target = $region8
    $region5: #{soft_erosion.3} parent=1 // loop_body
      %s17 = ssub.s32 %s12, 1
      %s18 = ssub.s32 %s12, 2
      %s25 = sadd.s32 1, %s20
      %p26 = scmp.ge.s32.totalorder %s25, 1
      %s27 = scalar_select %p26, 0, %s25
      %s28 = sadd.s32 1, %s19
      %s29 = scalar_select %p26, %s28, %s19
      %p30 = scmp.ge.s32.totalorder %s29, 2
      %s31 = scalar_select %p30, 0, %s29
      %s33 = sadd.s32 %s32, 1
      %p36 = scmp.eq.s32.totalorder %s12, 1
      %p37 = scmp.ne.s32.totalorder %s32, %s34
      %p38 = scmp.eq.s32.totalorder %s12, 0
      %p39 = por %p37, %p38
      %p40 = scmp.ne.s32.totalorder %s32, %s34
      %p41 = scmp.eq.s32.totalorder %s17, 1
      %p42 = por %p40, %p41
      %p43 = scmp.ne.s32.totalorder %s34, %s35
      %p44 = scmp.eq.s32.totalorder %s17, 0
      %p45 = por %p43, %p44
      %p46 = scmp.ne.s32.totalorder %s34, %s35
      %p47 = scmp.eq.s32.totalorder %s18, 1
      %p48 = por %p46, %p47
      %p50 = scmp.ne.s32.totalorder %s35, %s49
      %p51 = scmp.eq.s32.totalorder %s18, 0
      %p52 = por %p50, %p51
      %s53 = ssub.s32 %s19, %s31
      %s54 = ssub.s32 %s20, %s27
      %s55 = sor.u32 %s53, %s54
      %p56 = scmp.eq.s32.totalorder %s55, 0
      %s58 = sadd.s32 %s57, 1
      %s59 = scalar_select %p56, %s57, %s58
      %p62 = pneg %p56
      %p63 = scmp.eq.s32.totalorder %s12, 1
      %p64 = por %p62, %p63
      %p65 = scmp.ne.s32.totalorder %s57, %s60
      %p66 = scmp.eq.s32.totalorder %s12, 0
      %p67 = por %p65, %p66
      %p68 = scmp.ne.s32.totalorder %s57, %s60
      %p69 = scmp.eq.s32.totalorder %s17, 1
      %p70 = por %p68, %p69
      %p71 = scmp.ne.s32.totalorder %s60, %s61
      %p72 = scmp.eq.s32.totalorder %s17, 0
      %p73 = por %p71, %p72
      %p74 = scmp.ne.s32.totalorder %s60, %s61
      %p75 = scmp.eq.s32.totalorder %s18, 1
      %p76 = por %p74, %p75
      %p78 = scmp.ne.s32.totalorder %s61, %s77
      %p79 = scmp.eq.s32.totalorder %s18, 0
      %p80 = por %p78, %p79
      %s81 = ssub.s32 %s19, %s31
      %s82 = ssub.s32 %s20, %s27
      %s83 = sor.u32 %s81, %s82
      %p84 = scmp.eq.s32.totalorder %s83, 0
      %s86 = sadd.s32 %s85, 1
      %s87 = scalar_select %p84, %s85, %s86
      %p90 = pneg %p84
      %p91 = scmp.eq.s32.totalorder %s12, 1
      %p92 = por %p90, %p91
      %p93 = scmp.ne.s32.totalorder %s85, %s88
      %p94 = scmp.eq.s32.totalorder %s12, 0
      %p95 = por %p93, %p94
      %p96 = scmp.ne.s32.totalorder %s85, %s88
      %p97 = scmp.eq.s32.totalorder %s17, 1
      %p98 = por %p96, %p97
      %p99 = scmp.ne.s32.totalorder %s88, %s89
      %p100 = scmp.eq.s32.totalorder %s17, 0
      %p101 = por %p99, %p100
      %p102 = scmp.ne.s32.totalorder %s88, %s89
      %p103 = scmp.eq.s32.totalorder %s18, 1
      %p104 = por %p102, %p103
      %p106 = scmp.ne.s32.totalorder %s89, %s105
      %p107 = scmp.eq.s32.totalorder %s18, 0
      %p108 = por %p106, %p107
      %p109 = scmp.le.s32.totalorder 1, %s12
      %p110 = scmp.lt.s32.totalorder %s12, 3
      %p111 = pnand %p109, %p110
      %p112 = pneg %p111
      // Predicated region
      $region9: #{soft_erosion.3} parent=5 // pred_check
        _
      $region10: #{soft_erosion.3} parent=5 // pred_check_branch
        %114 = sbr.rel (%p111) target = $region12
      $region11: #{soft_erosion.3} parent=5 // pred_region
        %s115 = ssub.s32 %s12, 1
        // Predicated region
        $region13: #{soft_erosion.3} parent=11 // pred_check
          %p116 = pneg %p45
        $region14: #{soft_erosion.3} parent=11 // pred_check_branch
          %118 = sbr.rel (%p116) target = $region16
        $region15: #{soft_erosion.3} parent=11 // pred_region
          _
        $region16: #{soft_erosion.3} parent=11 // pred_fallthru
          _
      $region12: #{soft_erosion.3} parent=5 // pred_fallthru
        _
      %p119 = scmp.lt.s32.totalorder %s12, 2
      // Predicated region
      $region17: #{soft_erosion.3} parent=5 // pred_check
        %p120 = pneg %p119
      $region18: #{soft_erosion.3} parent=5 // pred_check_branch
        %122 = sbr.rel (%p120) target = $region20
      $region19: #{soft_erosion.3} parent=5 // pred_region
        // Predicated region
        $region21: #{soft_erosion.3} parent=19 // pred_check
          %p123 = pneg %p67
        $region22: #{soft_erosion.3} parent=19 // pred_check_branch
          %125 = sbr.rel (%p123) target = $region24
        $region23: #{soft_erosion.3} parent=19 // pred_region
          %p126 = scmp.lt.s32.totalorder %s19, 1
          %s127 = scalar_select %p126, %s19, 1
          %p128 = scmp.lt.s32.totalorder %s20, 0
          %s129 = scalar_select %p128, %s20, 0
          %s130 = smul.addr %s129, 2
          %s131 = smul.addr %s127, 2
          %s132 = sadd.s32 %s130, %s131
          %s133 = smul.addr %s132, 8
          %s134 = scalar_lea.vmem %s1, %s133
        $region24: #{soft_erosion.3} parent=19 // pred_fallthru
          _
      $region20: #{soft_erosion.3} parent=5 // pred_fallthru
        _
      %p135 = scmp.le.s32.totalorder 1, %s12
      %p136 = scmp.lt.s32.totalorder %s12, 3
      %p137 = pnand %p135, %p136
      %p138 = pneg %p137
      // Predicated region
      $region25: #{soft_erosion.3} parent=5 // pred_check
        _
      $region26: #{soft_erosion.3} parent=5 // pred_check_branch
        %140 = sbr.rel (%p137) target = $region28
      $region27: #{soft_erosion.3} parent=5 // pred_region
        %s141 = ssub.s32 %s12, 1
        %p142 = pneg %p45
        %p143 = pneg %p42
        %p144 = scmp.lt.s32.totalorder %s21, 1
        %s145 = scalar_select %p144, %s21, 1
        %p146 = scmp.lt.s32.totalorder %s22, 0
        %s147 = scalar_select %p146, %s22, 0
        %s148 = smul.addr %s147, 2
        %s149 = smul.addr %s145, 2
        %s150 = sadd.s32 %s148, %s149
        %s151 = smul.addr %s150, 8
        %s152 = scalar_lea.vmem %s1, %s151
        %p153 = pneg %p73
        %p154 = pneg %p70
        %p155 = pneg %p101
        %p156 = pneg %p98
        %s157 = sand.u32 %s88, 1
        %s158 = scalar_lea.sflag [#allocation4], %s157
        %s159 = sand.u32 %s88, 1
        %s160 = smul.addr %s159, 16
        %s161 = scalar_lea.vmem [#allocation3], %s160
        %p162 = scmp.lt.s32.totalorder %s21, 1
        %s163 = scalar_select %p162, %s21, 1
        %p164 = scmp.lt.s32.totalorder %s22, 0
        %s165 = scalar_select %p164, %s22, 0
        %s166 = smul.addr %s165, 2
        %s167 = smul.addr %s163, 2
        %s168 = sadd.s32 %s166, %s167
        %s169 = smul.addr %s168, 8
        %s170 = scalar_lea.vmem %s1, %s169
        %s171 = sld [smem:[#allocation2]]
        %v172 = vld [vmem:[%s170] sm:$0xff]
        %v173 = vld [vmem:[%s170 + $0x8] sm:$0xff]
        %vm174 = vcmp.ge.f32.partialorder %v172, 0.6
        %vm175 = vcmp.ge.f32.partialorder %v173, 0.6
        %v176 = vstv %s171
        %v177 = vrcp.pop %v176
        %v178 = vmul.f32 %v172, %v177
        %v179 = vmul.f32 %v173, %v177
        %v180 = vsel %vm174, 1.0, %v178
        %v181 = vsel %vm175, 1.0, %v179
        %vm182 = vcmask 130048
        %183 = vst.msk [vmem:[%s161] sm:$0xff] %vm182, %v180
        %184 = vst.msk [vmem:[%s161 + $0x8] sm:$0xff] %vm182, %v181
        %s185 = sand.u32 %s88, 1
        %s186 = scalar_lea.sflag [#allocation4], %s185
        %s187 = sand.u32 %s88, 1
        %s188 = smul.addr %s187, 16
        %s189 = scalar_lea.vmem [#allocation3], %s188
        // Predicated region
        $region29: #{soft_erosion.3} parent=27 // pred_check
          %p190 = pneg %p98
        $region30: #{soft_erosion.3} parent=27 // pred_check_branch
          %192 = sbr.rel (%p190) target = $region32
        $region31: #{soft_erosion.3} parent=27 // pred_region
          %s194 = ssub.s32 256, 256
          %195 = vsyncadd %s186, %s194
          %s196 = smul.addr %s22, 2
          %s197 = smul.addr %s21, 2
          %s198 = sadd.s32 %s196, %s197
          %s199 = smul.addr %s198, 128
          %s200 = scalar_lea.hbm %s2, %s199
          %s201 = sshll.u32 %s189, 4
          %s202 = int_to_ptr.vmem [resolvable:$true] %s201
          %207 = dma.vmem_to_hbm [thread:$0]  %s202, 256, %s200, %s186, 128, 128, 8
        $region32: #{soft_erosion.3} parent=27 // pred_fallthru
          _
      $region28: #{soft_erosion.3} parent=5 // pred_fallthru
        _
      %p208 = scmp.le.s32.totalorder 2, %s12
      // Predicated region
      $region33: #{soft_erosion.3} parent=5 // pred_check
        %p209 = pneg %p208
      $region34: #{soft_erosion.3} parent=5 // pred_check_branch
        %211 = sbr.rel (%p209) target = $region36
      $region35: #{soft_erosion.3} parent=5 // pred_region
        %s212 = ssub.s32 %s12, 2
        // Predicated region
        $region37: #{soft_erosion.3} parent=35 // pred_check
          %p213 = pneg %p104
        $region38: #{soft_erosion.3} parent=35 // pred_check_branch
          %215 = sbr.rel (%p213) target = $region40
        $region39: #{soft_erosion.3} parent=35 // pred_region
          %s216 = sand.u32 %s89, 1
          %s217 = scalar_lea.sflag [#allocation4], %s216
          %s218 = sand.u32 %s89, 1
          %s219 = smul.addr %s218, 16
          %s220 = scalar_lea.vmem [#allocation3], %s219
          %221 = dma.done %s217, 256
        $region40: #{soft_erosion.3} parent=35 // pred_fallthru
          _
      $region36: #{soft_erosion.3} parent=5 // pred_fallthru
        _
    $region6: #{soft_erosion.3} parent=1 // loop_footer
      %s16 = sadd.s32 1, %s12
    $region7: #{soft_erosion.3} parent=1 // loop_footer_branch
      %11 = sbr.rel target = $region3
    $region8: #{soft_erosion.3} parent=1 // loop_exit
      _
    %222 = vsyncpa [#allocation4], 1
    %s223 = scalar_lea.sflag [#allocation4], 1
    %224 = vsyncpa %s223, 1

// kernel: soft_erosion.2
$region0: #{soft_erosion.2}
  #allocation0 [shape = 'u32[]', space=smem, size = 0x4, offset = 0x4, fixed_abs, tag = 'smem constant byte address 0x4 - core index']
  #allocation1 [shape = 'u32[144,128]{1,0:T(1,128)}', space=vmem, size = 0x12000, scoped, tag = 'internal scratch']
  #allocation2 [shape = 'f32[30,16]{1,0:T(8,128)}', space=vmem, size = 0x4000, scoped, tag = 'scratch operand']
  %s0 = inlined_call_operand.hbm [shape: f32[2,1,16,16], index: 0, kind: input, shape index: {}]
  %s1 = inlined_call_operand.hbm [shape: f32[15,16,16], index: 1, kind: input, shape index: {}]
  %s2 = inlined_call_operand.vmem [shape: f32[2,1,16,16], index: 2, kind: output, shape index: {0}]
  %s3 = inlined_call_operand.vmem [shape: f32[2,1,16,1], index: 3, kind: output, shape index: {1}]
  %4 = xla_tuple %s2, %s3
  %s5 = sld [smem:[#allocation0]]
  $region57: #{soft_erosion.2} parent=0
    _
  %s7 = ssub.s32 1, %s5
  %s8 = scalar_select 0, %s7, %s5
  $region1: #{soft_erosion.2} parent=0
    #allocation3 [shape = 'u8[16384]{0}', space=vmem, size = 0x4000, scoped, tag = 'input window, operand 0']
    #allocation4 [shape = 's32[2]{0}', space=sflag, size = 0x8, scoped, tag = 'scoped memory for soft_erosion.2']
    #allocation5 [shape = 'u8[122880]{0}', space=vmem, size = 0x1e000, scoped, tag = 'input window, operand 1, single buffered']
    #allocation6 [shape = 's32[1]{0}', space=sflag, size = 0x4, scoped, tag = 'scoped memory for soft_erosion.2']
    %9 = vsyncpa [#allocation4], 0
    %s10 = scalar_lea.sflag [#allocation4], 1
    %11 = vsyncpa %s10, 0
    %12 = vsyncpa [#allocation6], 0
    loop: start=0, step=1, limit=4
    $region2: #{soft_erosion.2} parent=1 // loop_pre_header
      _
    $region3: #{soft_erosion.2} parent=1 // loop_header
      %s14 = sphi 0, %s18
      %p15 = scmp.ge.s32.totalorder %s14, 4
      %s21 = sphi 0, %s33
      %s22 = sphi 0, %s29
      %s23 = sphi 0, %s21
      %s24 = sphi 0, %s22
      %s25 = sphi 0, %s23
      %s26 = sphi 0, %s24
      %s38 = sphi 0, %s40
      %s41 = sphi 0, %s38
      %s42 = sphi 0, %s41
      %s58 = sphi 0, %s42
      %s62 = sphi 0, %s62
      %s64 = sphi 0, %s62
      %s65 = sphi 0, %s64
      %s79 = sphi 0, %s65
      %s87 = sphi 0, %s89
      %s90 = sphi 0, %s87
      %s91 = sphi 0, %s90
      %s107 = sphi 0, %s91
      %s115 = sphi 0, %s117
      %s118 = sphi 0, %s115
      %s119 = sphi 0, %s118
      %s135 = sphi 0, %s119
    $region4: #{soft_erosion.2} parent=1 // loop_header_branch
      %17 = sbr.rel (%p15) target = $region8
    $region5: #{soft_erosion.2} parent=1 // loop_body
      %s19 = ssub.s32 %s14, 1
      %s20 = ssub.s32 %s14, 2
      %s27 = sadd.s32 1, %s22
      %p28 = scmp.ge.s32.totalorder %s27, 1
      %s29 = scalar_select %p28, 0, %s27
      %s30 = sadd.s32 1, %s21
      %s31 = scalar_select %p28, %s30, %s21
      %p32 = scmp.ge.s32.totalorder %s31, 2
      %s33 = scalar_select %p32, 0, %s31
      %s34 = ssub.s32 %s21, %s33
      %s35 = ssub.s32 %s22, %s29
      %s36 = sor.u32 %s34, %s35
      %p37 = scmp.eq.s32.totalorder %s36, 0
      %s39 = sadd.s32 %s38, 1
      %s40 = scalar_select %p37, %s38, %s39
      %p43 = pneg %p37
      %p44 = scmp.eq.s32.totalorder %s14, 1
      %p45 = por %p43, %p44
      %p46 = scmp.ne.s32.totalorder %s38, %s41
      %p47 = scmp.eq.s32.totalorder %s14, 0
      %p48 = por %p46, %p47
      %p49 = scmp.ne.s32.totalorder %s38, %s41
      %p50 = scmp.eq.s32.totalorder %s19, 1
      %p51 = por %p49, %p50
      %p52 = scmp.ne.s32.totalorder %s41, %s42
      %p53 = scmp.eq.s32.totalorder %s19, 0
      %p54 = por %p52, %p53
      %p55 = scmp.ne.s32.totalorder %s41, %s42
      %p56 = scmp.eq.s32.totalorder %s20, 1
      %p57 = por %p55, %p56
      %p59 = scmp.ne.s32.totalorder %s42, %s58
      %p60 = scmp.eq.s32.totalorder %s20, 0
      %p61 = por %p59, %p60
      %s63 = sadd.s32 %s62, 1
      %p66 = scmp.eq.s32.totalorder %s14, 1
      %p67 = scmp.ne.s32.totalorder %s62, %s64
      %p68 = scmp.eq.s32.totalorder %s14, 0
      %p69 = por %p67, %p68
      %p70 = scmp.ne.s32.totalorder %s62, %s64
      %p71 = scmp.eq.s32.totalorder %s19, 1
      %p72 = por %p70, %p71
      %p73 = scmp.ne.s32.totalorder %s64, %s65
      %p74 = scmp.eq.s32.totalorder %s19, 0
      %p75 = por %p73, %p74
      %p76 = scmp.ne.s32.totalorder %s64, %s65
      %p77 = scmp.eq.s32.totalorder %s20, 1
      %p78 = por %p76, %p77
      %p80 = scmp.ne.s32.totalorder %s65, %s79
      %p81 = scmp.eq.s32.totalorder %s20, 0
      %p82 = por %p80, %p81
      %s83 = ssub.s32 %s21, %s33
      %s84 = ssub.s32 %s22, %s29
      %s85 = sor.u32 %s83, %s84
      %p86 = scmp.eq.s32.totalorder %s85, 0
      %s88 = sadd.s32 %s87, 1
      %s89 = scalar_select %p86, %s87, %s88
      %p92 = pneg %p86
      %p93 = scmp.eq.s32.totalorder %s14, 1
      %p94 = por %p92, %p93
      %p95 = scmp.ne.s32.totalorder %s87, %s90
      %p96 = scmp.eq.s32.totalorder %s14, 0
      %p97 = por %p95, %p96
      %p98 = scmp.ne.s32.totalorder %s87, %s90
      %p99 = scmp.eq.s32.totalorder %s19, 1
      %p100 = por %p98, %p99
      %p101 = scmp.ne.s32.totalorder %s90, %s91
      %p102 = scmp.eq.s32.totalorder %s19, 0
      %p103 = por %p101, %p102
      %p104 = scmp.ne.s32.totalorder %s90, %s91
      %p105 = scmp.eq.s32.totalorder %s20, 1
      %p106 = por %p104, %p105
      %p108 = scmp.ne.s32.totalorder %s91, %s107
      %p109 = scmp.eq.s32.totalorder %s20, 0
      %p110 = por %p108, %p109
      %s111 = ssub.s32 %s21, %s33
      %s112 = ssub.s32 %s22, %s29
      %s113 = sor.u32 %s111, %s112
      %p114 = scmp.eq.s32.totalorder %s113, 0
      %s116 = sadd.s32 %s115, 1
      %s117 = scalar_select %p114, %s115, %s116
      %p120 = pneg %p114
      %p121 = scmp.eq.s32.totalorder %s14, 1
      %p122 = por %p120, %p121
      %p123 = scmp.ne.s32.totalorder %s115, %s118
      %p124 = scmp.eq.s32.totalorder %s14, 0
      %p125 = por %p123, %p124
      %p126 = scmp.ne.s32.totalorder %s115, %s118
      %p127 = scmp.eq.s32.totalorder %s19, 1
      %p128 = por %p126, %p127
      %p129 = scmp.ne.s32.totalorder %s118, %s119
      %p130 = scmp.eq.s32.totalorder %s19, 0
      %p131 = por %p129, %p130
      %p132 = scmp.ne.s32.totalorder %s118, %s119
      %p133 = scmp.eq.s32.totalorder %s20, 1
      %p134 = por %p132, %p133
      %p136 = scmp.ne.s32.totalorder %s119, %s135
      %p137 = scmp.eq.s32.totalorder %s20, 0
      %p138 = por %p136, %p137
      %p139 = scmp.le.s32.totalorder 1, %s14
      %p140 = scmp.lt.s32.totalorder %s14, 3
      %p141 = pnand %p139, %p140
      %p142 = pneg %p141
      // Predicated region
      $region9: #{soft_erosion.2} parent=5 // pred_check
        _
      $region10: #{soft_erosion.2} parent=5 // pred_check_branch
        %144 = sbr.rel (%p141) target = $region12
      $region11: #{soft_erosion.2} parent=5 // pred_region
        %s145 = ssub.s32 %s14, 1
        // Predicated region
        $region13: #{soft_erosion.2} parent=11 // pred_check
          %p146 = pneg %p75
        $region14: #{soft_erosion.2} parent=11 // pred_check_branch
          %148 = sbr.rel (%p146) target = $region16
        $region15: #{soft_erosion.2} parent=11 // pred_region
          %s150 = ssub.s32 3840, 3840
          %151 = vsyncadd [#allocation6], %s150
          %s152 = sshll.u32 [#allocation5], 4
          %s153 = int_to_ptr.vmem [resolvable:$true] %s152
          %158 = dma.hbm_to_vmem [thread:$0]  %s1, 3840, %s153, [#allocation6], 128, 128, 8
        $region16: #{soft_erosion.2} parent=11 // pred_fallthru
          _
      $region12: #{soft_erosion.2} parent=5 // pred_fallthru
        _
      %p159 = scmp.lt.s32.totalorder %s14, 2
      // Predicated region
      $region17: #{soft_erosion.2} parent=5 // pred_check
        %p160 = pneg %p159
      $region18: #{soft_erosion.2} parent=5 // pred_check_branch
        %162 = sbr.rel (%p160) target = $region20
      $region19: #{soft_erosion.2} parent=5 // pred_region
        // Predicated region
        $region21: #{soft_erosion.2} parent=19 // pred_check
          %p163 = pneg %p48
        $region22: #{soft_erosion.2} parent=19 // pred_check_branch
          %165 = sbr.rel (%p163) target = $region24
        $region23: #{soft_erosion.2} parent=19 // pred_region
          %s166 = sand.u32 %s38, 1
          %s167 = scalar_lea.sflag [#allocation4], %s166
          %s168 = sand.u32 %s38, 1
          %s169 = smul.addr %s168, 16
          %s170 = scalar_lea.vmem [#allocation3], %s169
          %s172 = ssub.s32 256, 256
          %173 = vsyncadd %s167, %s172
          %s174 = smul.addr %s22, 2
          %s175 = smul.addr %s21, 2
          %s176 = sadd.s32 %s174, %s175
          %s177 = smul.addr %s176, 128
          %s178 = scalar_lea.hbm %s0, %s177
          %s179 = sshll.u32 %s170, 4
          %s180 = int_to_ptr.vmem [resolvable:$true] %s179
          %185 = dma.hbm_to_vmem [thread:$0]  %s178, 256, %s180, %s167, 128, 128, 8
        $region24: #{soft_erosion.2} parent=19 // pred_fallthru
          _
      $region20: #{soft_erosion.2} parent=5 // pred_fallthru
        _
      %p186 = scmp.le.s32.totalorder 1, %s14
      %p187 = scmp.lt.s32.totalorder %s14, 3
      %p188 = pnand %p186, %p187
      %p189 = pneg %p188
      // Predicated region
      $region25: #{soft_erosion.2} parent=5 // pred_check
        _
      $region26: #{soft_erosion.2} parent=5 // pred_check_branch
        %191 = sbr.rel (%p188) target = $region28
      $region27: #{soft_erosion.2} parent=5 // pred_region
        %s192 = ssub.s32 %s14, 1
        %s193 = sand.u32 %s41, 1
        %s194 = scalar_lea.sflag [#allocation4], %s193
        %s195 = sand.u32 %s41, 1
        %s196 = smul.addr %s195, 16
        %s197 = scalar_lea.vmem [#allocation3], %s196
        // Predicated region
        $region29: #{soft_erosion.2} parent=27 // pred_check
          %p198 = pneg %p54
        $region30: #{soft_erosion.2} parent=27 // pred_check_branch
          %200 = sbr.rel (%p198) target = $region32
        $region31: #{soft_erosion.2} parent=27 // pred_region
          %201 = dma.done %s194, 256
        $region32: #{soft_erosion.2} parent=27 // pred_fallthru
          _
        // Predicated region
        $region33: #{soft_erosion.2} parent=27 // pred_check
          %p202 = pneg %p75
        $region34: #{soft_erosion.2} parent=27 // pred_check_branch
          %204 = sbr.rel (%p202) target = $region36
        $region35: #{soft_erosion.2} parent=27 // pred_region
          %205 = dma.done [#allocation6], 3840
        $region36: #{soft_erosion.2} parent=27 // pred_fallthru
          _
        %s206 = sand.u32 %s41, 1
        %s207 = scalar_lea.sflag [#allocation4], %s206
        %s208 = sand.u32 %s41, 1
        %s209 = smul.addr %s208, 16
        %s210 = scalar_lea.vmem [#allocation3], %s209
        %p211 = pneg %p54
        %p212 = pneg %p51
        %p213 = pneg %p75
        %p214 = pneg %p72
        %p215 = pneg %p103
        %p216 = pneg %p100
        %p217 = scmp.lt.s32.totalorder %s23, 1
        %s218 = scalar_select %p217, %s23, 1
        %p219 = scmp.lt.s32.totalorder %s24, 0
        %s220 = scalar_select %p219, %s24, 0
        %s221 = smul.addr %s220, 2
        %s222 = smul.addr %s218, 2
        %s223 = sadd.s32 %s221, %s222
        %s224 = smul.addr %s223, 8
        %s225 = scalar_lea.vmem %s2, %s224
        %p226 = pneg %p131
        %p227 = pneg %p128
        %p228 = scmp.lt.s32.totalorder %s23, 1
        %s229 = scalar_select %p228, %s23, 1
        %p230 = scmp.lt.s32.totalorder %s24, 0
        %s231 = scalar_select %p230, %s24, 0
        %s232 = smul.addr %s231, 2
        %s233 = smul.addr %s229, 2
        %s234 = sadd.s32 %s232, %s233
        %s235 = smul.addr %s234, 8
        %s236 = scalar_lea.vmem %s3, %s235
        %p237 = scmp.lt.s32.totalorder %s23, 1
        %s238 = scalar_select %p237, %s23, 1
        %p239 = scmp.lt.s32.totalorder %s24, 0
        %s240 = scalar_select %p239, %s24, 0
        %s241 = smul.addr %s240, 2
        %s242 = smul.addr %s238, 2
        %s243 = sadd.s32 %s241, %s242
        %s244 = smul.addr %s243, 8
        %s245 = scalar_lea.vmem %s2, %s244
        %p246 = scmp.lt.s32.totalorder %s23, 1
        %s247 = scalar_select %p246, %s23, 1
        %p248 = scmp.lt.s32.totalorder %s24, 0
        %s249 = scalar_select %p248, %s24, 0
        %s250 = smul.addr %s249, 2
        %s251 = smul.addr %s247, 2
        %s252 = sadd.s32 %s250, %s251
        %s253 = smul.addr %s252, 8
        %s254 = scalar_lea.vmem %s3, %s253
        %vm255 = vcmask 130048
        %256 = vst.msk [vmem:[#allocation2] sm:$0xff] %vm255, 0.0
        %257 = vst.msk [vmem:[#allocation2 + $0x8] sm:$0xff] %vm255, 0.0
        %258 = vst.msk [vmem:[#allocation2 + $0x10] sm:$0xff] %vm255, 0.0
        %vm259 = vcmask 128000
        %260 = vst.msk [vmem:[#allocation2 + $0x18] sm:$0x3f] %vm259, 0.0
        %v261 = vld [vmem:[%s197] sm:$0xff]
        %v262 = vld [vmem:[%s197 + $0x8] sm:$0xff]
        %263 = vst.msk [vmem:[#allocation2 + $0x7] sm:$0xff] %vm255, %v261
        %264 = vst.msk [vmem:[#allocation2 + $0xf] sm:$0xff] %vm255, %v262
        %v265 = vld [vmem:[#allocation2] sm:$0xff]
        %v266 = vld [vmem:[#allocation2 + $0x8] sm:$0xff]
        %v267 = vld [vmem:[#allocation5] sm:$0xff]
        %v268 = vld [vmem:[#allocation5 + $0x8] sm:$0xff]
        %v269 = vld [vmem:[#allocation2 + $0x1] sm:$0xff]
        %v270 = vld [vmem:[#allocation2 + $0x9] sm:$0xff]
        %s271 = scalar_lea.vmem [#allocation5], 16
        %v272 = vld [vmem:[%s271] sm:$0xff]
        %v273 = vld [vmem:[%s271 + $0x8] sm:$0xff]
        %v274 = vld [vmem:[#allocation2 + $0x2] sm:$0xff]
        %v275 = vld [vmem:[#allocation2 + $0xa] sm:$0xff]
        %s276 = scalar_lea.vmem [#allocation5], 32
        %v277 = vld [vmem:[%s276] sm:$0xff]
        %v278 = vld [vmem:[%s276 + $0x8] sm:$0xff]
        %v279 = vld [vmem:[#allocation2 + $0x3] sm:$0xff]
        %v280 = vld [vmem:[#allocation2 + $0xb] sm:$0xff]
        %s281 = scalar_lea.vmem [#allocation5], 48
        %v282 = vld [vmem:[%s281] sm:$0xff]
        %v283 = vld [vmem:[%s281 + $0x8] sm:$0xff]
        %v285 = vsel %vm255, %v279, 0
        %v288 = vsel %vm255, %v280, 0
        %290 = vmatprep.subr.mxu0 0.0
        %291 = vmatpush1.msra.mxu0 %v282
        %292 = vmatprep.subr.mxu0 0.0
        %293 = vmatpush1.msra.mxu0 %v283
        %294 = vmatprep.subr.mxu0 0.0
        %295 = vmatpush1.msra.mxu0 0.0
        %296 = vmatprep.subr.mxu0 0.0
        %297 = vmatpush1.msra.mxu0 0.0
        %298 = vmatprep.subr.mxu0 0.0
        %299 = vmatpush1.msra.mxu0 0.0
        %300 = vmatprep.subr.mxu0 0.0
        %301 = vmatpush1.msra.mxu0 0.0
        %302 = vmatprep.subr.mxu0 0.0
        %303 = vmatpush1.msra.mxu0 0.0
        %304 = vmatprep.subr.mxu0 0.0
        %305 = vmatpush1.msra.mxu0 0.0
        %306 = vmatprep.subr.mxu0 0.0
        %307 = vmatpush1.msra.mxu0 0.0
        %308 = vmatprep.subr.mxu0 0.0
        %309 = vmatpush1.msra.mxu0 0.0
        %310 = vmatprep.subr.mxu0 0.0
        %311 = vmatpush1.msra.mxu0 0.0
        %312 = vmatprep.subr.mxu0 0.0
        %313 = vmatpush1.msra.mxu0 0.0
        %314 = vmatprep.subr.mxu0 0.0
        %315 = vmatpush1.msra.mxu0 0.0
        %316 = vmatprep.subr.mxu0 0.0
        %317 = vmatpush1.msra.mxu0 0.0
        %318 = vmatprep.subr.mxu0 0.0
        %319 = vmatpush1.msra.mxu0 0.0
        %320 = vmatprep.subr.mxu0 0.0
        %321 = vmatpush1.msra.mxu0 0.0
        %322 = vmatprep.subr.mxu0 0.0
        %323 = vmatpush1.msra.mxu0 0.0
        %324 = vmatprep.subr.mxu0 0.0
        %325 = vmatpush1.msra.mxu0 0.0
        %326 = vmatprep.subr.mxu0 0.0
        %327 = vmatpush1.msra.mxu0 0.0
        %328 = vmatprep.subr.mxu0 0.0
        %329 = vmatpush1.msra.mxu0 0.0
        %330 = vmatprep.subr.mxu0 0.0
        %331 = vmatpush1.msra.mxu0 0.0
        %332 = vmatprep.subr.mxu0 0.0
        %333 = vmatpush1.msra.mxu0 0.0
        %334 = vmatprep.subr.mxu0 0.0
        %335 = vmatpush1.msra.mxu0 0.0
        %336 = vmatprep.subr.mxu0 0.0
        %337 = vmatpush1.msra.mxu0 0.0
        %338 = vmatprep.subr.mxu0 0.0
        %339 = vmatpush1.msra.mxu0 0.0
        %340 = vmatprep.subr.mxu0 0.0
        %341 = vmatpush1.msra.mxu0 0.0
        %342 = vmatprep.subr.mxu0 0.0
        %343 = vmatpush1.msra.mxu0 0.0
        %344 = vmatprep.subr.mxu0 0.0
        %345 = vmatpush1.msra.mxu0 0.0
        %346 = vmatprep.subr.mxu0 0.0
        %347 = vmatpush1.msra.mxu0 0.0
        %348 = vmatprep.subr.mxu0 0.0
        %349 = vmatpush1.msra.mxu0 0.0
        %350 = vmatprep.subr.mxu0 0.0
        %351 = vmatpush1.msra.mxu0 0.0
        %352 = vmatprep.subr.mxu0 0.0
        %353 = vmatpush1.msra.mxu0 0.0
        %354 = vmatprep.mubr.f32.mxu0 0.0
        %355 = vmatmul.mubr.f32.gmra.mrb[0].mxu0 %v285
        %v356 = vpop.f32.mrb[0].mxu0
        %v357 = vadd.f32 0.0, %v356
        %v358 = vpop.f32.mrb[0].mxu0
        %359 = vmatprep.mubr.f32.mxu0 0.0
        %360 = vmatmul.mubr.f32.gmra.mrb[0].mxu0 %v288
        %v361 = vpop.f32.mrb[0].mxu0
        %v362 = vadd.f32 0.0, %v361
        %v363 = vpop.f32.mrb[0].mxu0
        %364 = vdwg.mxu0
        %v366 = vsel %vm255, %v265, 0
        %v369 = vsel %vm255, %v266, 0
        %371 = vmatprep.subr.mxu0 0.0
        %372 = vmatpush1.msra.mxu0 %v267
        %373 = vmatprep.subr.mxu0 0.0
        %374 = vmatpush1.msra.mxu0 %v268
        %375 = vmatprep.subr.mxu0 0.0
        %376 = vmatpush1.msra.mxu0 0.0
        %377 = vmatprep.subr.mxu0 0.0
        %378 = vmatpush1.msra.mxu0 0.0
        %379 = vmatprep.subr.mxu0 0.0
        %380 = vmatpush1.msra.mxu0 0.0
        %381 = vmatprep.subr.mxu0 0.0
        %382 = vmatpush1.msra.mxu0 0.0
        %383 = vmatprep.subr.mxu0 0.0
        %384 = vmatpush1.msra.mxu0 0.0
        %385 = vmatprep.subr.mxu0 0.0
        %386 = vmatpush1.msra.mxu0 0.0
        %387 = vmatprep.subr.mxu0 0.0
        %388 = vmatpush1.msra.mxu0 0.0
        %389 = vmatprep.subr.mxu0 0.0
        %390 = vmatpush1.msra.mxu0 0.0
        %391 = vmatprep.subr.mxu0 0.0
        %392 = vmatpush1.msra.mxu0 0.0
        %393 = vmatprep.subr.mxu0 0.0
        %394 = vmatpush1.msra.mxu0 0.0
        %395 = vmatprep.subr.mxu0 0.0
        %396 = vmatpush1.msra.mxu0 0.0
        %397 = vmatprep.subr.mxu0 0.0
        %398 = vmatpush1.msra.mxu0 0.0
        %399 = vmatprep.subr.mxu0 0.0
        %400 = vmatpush1.msra.mxu0 0.0
        %401 = vmatprep.subr.mxu0 0.0
        %402 = vmatpush1.msra.mxu0 0.0
        %403 = vmatprep.subr.mxu0 0.0
        %404 = vmatpush1.msra.mxu0 0.0
        %405 = vmatprep.subr.mxu0 0.0
        %406 = vmatpush1.msra.mxu0 0.0
        %407 = vmatprep.subr.mxu0 0.0
        %408 = vmatpush1.msra.mxu0 0.0
        %409 = vmatprep.subr.mxu0 0.0
        %410 = vmatpush1.msra.mxu0 0.0
        %411 = vmatprep.subr.mxu0 0.0
        %412 = vmatpush1.msra.mxu0 0.0
        %413 = vmatprep.subr.mxu0 0.0
        %414 = vmatpush1.msra.mxu0 0.0
        %415 = vmatprep.subr.mxu0 0.0
        %416 = vmatpush1.msra.mxu0 0.0
        %417 = vmatprep.subr.mxu0 0.0
        %418 = vmatpush1.msra.mxu0 0.0
        %419 = vmatprep.subr.mxu0 0.0
        %420 = vmatpush1.msra.mxu0 0.0
        %421 = vmatprep.subr.mxu0 0.0
        %422 = vmatpush1.msra.mxu0 0.0
        %423 = vmatprep.subr.mxu0 0.0
        %424 = vmatpush1.msra.mxu0 0.0
        %425 = vmatprep.subr.mxu0 0.0
        %426 = vmatpush1.msra.mxu0 0.0
        %427 = vmatprep.subr.mxu0 0.0
        %428 = vmatpush1.msra.mxu0 0.0
        %429 = vmatprep.subr.mxu0 0.0
        %430 = vmatpush1.msra.mxu0 0.0
        %431 = vmatprep.subr.mxu0 0.0
        %432 = vmatpush1.msra.mxu0 0.0
        %433 = vmatprep.subr.mxu0 0.0
        %434 = vmatpush1.msra.mxu0 0.0
        %435 = vmatprep.mubr.f32.mxu0 0.0
        %436 = vmatmul.mubr.f32.gmra.mrb[0].mxu0 %v366
        %v437 = vpop.f32.mrb[0].mxu0
        %v438 = vadd.f32 %v357, %v437
        %v439 = vpop.f32.mrb[0].mxu0
        %440 = vmatprep.mubr.f32.mxu0 0.0
        %441 = vmatmul.mubr.f32.gmra.mrb[0].mxu0 %v369
        %v442 = vpop.f32.mrb[0].mxu0
        %v443 = vadd.f32 %v362, %v442
        %v444 = vpop.f32.mrb[0].mxu0
        %445 = vdwg.mxu0
        %v446 = vld [vmem:[#allocation2 + $0x4] sm:$0xff]
        %v447 = vld [vmem:[#allocation2 + $0xc] sm:$0xff]
        %s448 = scalar_lea.vmem [#allocation5], 64
        %v449 = vld [vmem:[%s448] sm:$0xff]
        %v450 = vld [vmem:[%s448 + $0x8] sm:$0xff]
        %v452 = vsel %vm255, %v446, 0
        %v455 = vsel %vm255, %v447, 0
        %457 = vmatprep.subr.mxu0 0.0
        %458 = vmatpush1.msra.mxu0 %v449
        %459 = vmatprep.subr.mxu0 0.0
        %460 = vmatpush1.msra.mxu0 %v450
        %461 = vmatprep.subr.mxu0 0.0
        %462 = vmatpush1.msra.mxu0 0.0
        %463 = vmatprep.subr.mxu0 0.0
        %464 = vmatpush1.msra.mxu0 0.0
        %465 = vmatprep.subr.mxu0 0.0
        %466 = vmatpush1.msra.mxu0 0.0
        %467 = vmatprep.subr.mxu0 0.0
        %468 = vmatpush1.msra.mxu0 0.0
        %469 = vmatprep.subr.mxu0 0.0
        %470 = vmatpush1.msra.mxu0 0.0
        %471 = vmatprep.subr.mxu0 0.0
        %472 = vmatpush1.msra.mxu0 0.0
        %473 = vmatprep.subr.mxu0 0.0
        %474 = vmatpush1.msra.mxu0 0.0
        %475 = vmatprep.subr.mxu0 0.0
        %476 = vmatpush1.msra.mxu0 0.0
        %477 = vmatprep.subr.mxu0 0.0
        %478 = vmatpush1.msra.mxu0 0.0
        %479 = vmatprep.subr.mxu0 0.0
        %480 = vmatpush1.msra.mxu0 0.0
        %481 = vmatprep.subr.mxu0 0.0
        %482 = vmatpush1.msra.mxu0 0.0
        %483 = vmatprep.subr.mxu0 0.0
        %484 = vmatpush1.msra.mxu0 0.0
        %485 = vmatprep.subr.mxu0 0.0
        %486 = vmatpush1.msra.mxu0 0.0
        %487 = vmatprep.subr.mxu0 0.0
        %488 = vmatpush1.msra.mxu0 0.0
        %489 = vmatprep.subr.mxu0 0.0
        %490 = vmatpush1.msra.mxu0 0.0
        %491 = vmatprep.subr.mxu0 0.0
        %492 = vmatpush1.msra.mxu0 0.0
        %493 = vmatprep.subr.mxu0 0.0
        %494 = vmatpush1.msra.mxu0 0.0
        %495 = vmatprep.subr.mxu0 0.0
        %496 = vmatpush1.msra.mxu0 0.0
        %497 = vmatprep.subr.mxu0 0.0
        %498 = vmatpush1.msra.mxu0 0.0
        %499 = vmatprep.subr.mxu0 0.0
        %500 = vmatpush1.msra.mxu0 0.0
        %501 = vmatprep.subr.mxu0 0.0
        %502 = vmatpush1.msra.mxu0 0.0
        %503 = vmatprep.subr.mxu0 0.0
        %504 = vmatpush1.msra.mxu0 0.0
        %505 = vmatprep.subr.mxu0 0.0
        %506 = vmatpush1.msra.mxu0 0.0
        %507 = vmatprep.subr.mxu0 0.0
        %508 = vmatpush1.msra.mxu0 0.0
        %509 = vmatprep.subr.mxu0 0.0
        %510 = vmatpush1.msra.mxu0 0.0
        %511 = vmatprep.subr.mxu0 0.0
        %512 = vmatpush1.msra.mxu0 0.0
        %513 = vmatprep.subr.mxu0 0.0
        %514 = vmatpush1.msra.mxu0 0.0
        %515 = vmatprep.subr.mxu0 0.0
        %516 = vmatpush1.msra.mxu0 0.0
        %517 = vmatprep.subr.mxu0 0.0
        %518 = vmatpush1.msra.mxu0 0.0
        %519 = vmatprep.subr.mxu0 0.0
        %520 = vmatpush1.msra.mxu0 0.0
        %521 = vmatprep.mubr.f32.mxu0 0.0
        %522 = vmatmul.mubr.f32.gmra.mrb[0].mxu0 %v452
        %v523 = vpop.f32.mrb[0].mxu0
        %v524 = vadd.f32 0.0, %v523
        %v525 = vpop.f32.mrb[0].mxu0
        %526 = vmatprep.mubr.f32.mxu0 0.0
        %527 = vmatmul.mubr.f32.gmra.mrb[0].mxu0 %v455
        %v528 = vpop.f32.mrb[0].mxu0
        %v529 = vadd.f32 0.0, %v528
        %v530 = vpop.f32.mrb[0].mxu0
        %531 = vdwg.mxu0
        %v533 = vsel %vm255, %v269, 0
        %v536 = vsel %vm255, %v270, 0
        %538 = vmatprep.subr.mxu0 0.0
        %539 = vmatpush1.msra.mxu0 %v272
        %540 = vmatprep.subr.mxu0 0.0
        %541 = vmatpush1.msra.mxu0 %v273
        %542 = vmatprep.subr.mxu0 0.0
        %543 = vmatpush1.msra.mxu0 0.0
        %544 = vmatprep.subr.mxu0 0.0
        %545 = vmatpush1.msra.mxu0 0.0
        %546 = vmatprep.subr.mxu0 0.0
        %547 = vmatpush1.msra.mxu0 0.0
        %548 = vmatprep.subr.mxu0 0.0
        %549 = vmatpush1.msra.mxu0 0.0
        %550 = vmatprep.subr.mxu0 0.0
        %551 = vmatpush1.msra.mxu0 0.0
        %552 = vmatprep.subr.mxu0 0.0
        %553 = vmatpush1.msra.mxu0 0.0
        %554 = vmatprep.subr.mxu0 0.0
        %555 = vmatpush1.msra.mxu0 0.0
        %556 = vmatprep.subr.mxu0 0.0
        %557 = vmatpush1.msra.mxu0 0.0
        %558 = vmatprep.subr.mxu0 0.0
        %559 = vmatpush1.msra.mxu0 0.0
        %560 = vmatprep.subr.mxu0 0.0
        %561 = vmatpush1.msra.mxu0 0.0
        %562 = vmatprep.subr.mxu0 0.0
        %563 = vmatpush1.msra.mxu0 0.0
        %564 = vmatprep.subr.mxu0 0.0
        %565 = vmatpush1.msra.mxu0 0.0
        %566 = vmatprep.subr.mxu0 0.0
        %567 = vmatpush1.msra.mxu0 0.0
        %568 = vmatprep.subr.mxu0 0.0
        %569 = vmatpush1.msra.mxu0 0.0
        %570 = vmatprep.subr.mxu0 0.0
        %571 = vmatpush1.msra.mxu0 0.0
        %572 = vmatprep.subr.mxu0 0.0
        %573 = vmatpush1.msra.mxu0 0.0
        %574 = vmatprep.subr.mxu0 0.0
        %575 = vmatpush1.msra.mxu0 0.0
        %576 = vmatprep.subr.mxu0 0.0
        %577 = vmatpush1.msra.mxu0 0.0
        %578 = vmatprep.subr.mxu0 0.0
        %579 = vmatpush1.msra.mxu0 0.0
        %580 = vmatprep.subr.mxu0 0.0
        %581 = vmatpush1.msra.mxu0 0.0
        %582 = vmatprep.subr.mxu0 0.0
        %583 = vmatpush1.msra.mxu0 0.0
        %584 = vmatprep.subr.mxu0 0.0
        %585 = vmatpush1.msra.mxu0 0.0
        %586 = vmatprep.subr.mxu0 0.0
        %587 = vmatpush1.msra.mxu0 0.0
        %588 = vmatprep.subr.mxu0 0.0
        %589 = vmatpush1.msra.mxu0 0.0
        %590 = vmatprep.subr.mxu0 0.0
        %591 = vmatpush1.msra.mxu0 0.0
        %592 = vmatprep.subr.mxu0 0.0
        %593 = vmatpush1.msra.mxu0 0.0
        %594 = vmatprep.subr.mxu0 0.0
        %595 = vmatpush1.msra.mxu0 0.0
        %596 = vmatprep.subr.mxu0 0.0
        %597 = vmatpush1.msra.mxu0 0.0
        %598 = vmatprep.subr.mxu0 0.0
        %599 = vmatpush1.msra.mxu0 0.0
        %600 = vmatprep.subr.mxu0 0.0
        %601 = vmatpush1.msra.mxu0 0.0
        %602 = vmatprep.mubr.f32.mxu0 0.0
        %603 = vmatmul.mubr.f32.gmra.mrb[0].mxu0 %v533
        %v604 = vpop.f32.mrb[0].mxu0
        %v605 = vadd.f32 %v524, %v604
        %v606 = vpop.f32.mrb[0].mxu0
        %607 = vmatprep.mubr.f32.mxu0 0.0
        %608 = vmatmul.mubr.f32.gmra.mrb[0].mxu0 %v536
        %v609 = vpop.f32.mrb[0].mxu0
        %v610 = vadd.f32 %v529, %v609
        %v611 = vpop.f32.mrb[0].mxu0
        %612 = vdwg.mxu0
        %v613 = vld [vmem:[#allocation2 + $0x5] sm:$0xff]
        %v614 = vld [vmem:[#allocation2 + $0xd] sm:$0xff]
        %s615 = scalar_lea.vmem [#allocation5], 80
        %v616 = vld [vmem:[%s615] sm:$0xff]
        %v617 = vld [vmem:[%s615 + $0x8] sm:$0xff]
        %v619 = vsel %vm255, %v613, 0
        %v622 = vsel %vm255, %v614, 0
        %624 = vmatprep.subr.mxu0 0.0
        %625 = vmatpush1.msra.mxu0 %v616
        %626 = vmatprep.subr.mxu0 0.0
        %627 = vmatpush1.msra.mxu0 %v617
        %628 = vmatprep.subr.mxu0 0.0
        %629 = vmatpush1.msra.mxu0 0.0
        %630 = vmatprep.subr.mxu0 0.0
        %631 = vmatpush1.msra.mxu0 0.0
        %632 = vmatprep.subr.mxu0 0.0
        %633 = vmatpush1.msra.mxu0 0.0
        %634 = vmatprep.subr.mxu0 0.0
        %635 = vmatpush1.msra.mxu0 0.0
        %636 = vmatprep.subr.mxu0 0.0
        %637 = vmatpush1.msra.mxu0 0.0
        %638 = vmatprep.subr.mxu0 0.0
        %639 = vmatpush1.msra.mxu0 0.0
        %640 = vmatprep.subr.mxu0 0.0
        %641 = vmatpush1.msra.mxu0 0.0
        %642 = vmatprep.subr.mxu0 0.0
        %643 = vmatpush1.msra.mxu0 0.0
        %644 = vmatprep.subr.mxu0 0.0
        %645 = vmatpush1.msra.mxu0 0.0
        %646 = vmatprep.subr.mxu0 0.0
        %647 = vmatpush1.msra.mxu0 0.0
        %648 = vmatprep.subr.mxu0 0.0
        %649 = vmatpush1.msra.mxu0 0.0
        %650 = vmatprep.subr.mxu0 0.0
        %651 = vmatpush1.msra.mxu0 0.0
        %652 = vmatprep.subr.mxu0 0.0
        %653 = vmatpush1.msra.mxu0 0.0
        %654 = vmatprep.subr.mxu0 0.0
        %655 = vmatpush1.msra.mxu0 0.0
        %656 = vmatprep.subr.mxu0 0.0
        %657 = vmatpush1.msra.mxu0 0.0
        %658 = vmatprep.subr.mxu0 0.0
        %659 = vmatpush1.msra.mxu0 0.0
        %660 = vmatprep.subr.mxu0 0.0
        %661 = vmatpush1.msra.mxu0 0.0
        %662 = vmatprep.subr.mxu0 0.0
        %663 = vmatpush1.msra.mxu0 0.0
        %664 = vmatprep.subr.mxu0 0.0
        %665 = vmatpush1.msra.mxu0 0.0
        %666 = vmatprep.subr.mxu0 0.0
        %667 = vmatpush1.msra.mxu0 0.0
        %668 = vmatprep.subr.mxu0 0.0
        %669 = vmatpush1.msra.mxu0 0.0
        %670 = vmatprep.subr.mxu0 0.0
        %671 = vmatpush1.msra.mxu0 0.0
        %672 = vmatprep.subr.mxu0 0.0
        %673 = vmatpush1.msra.mxu0 0.0
        %674 = vmatprep.subr.mxu0 0.0
        %675 = vmatpush1.msra.mxu0 0.0
        %676 = vmatprep.subr.mxu0 0.0
        %677 = vmatpush1.msra.mxu0 0.0
        %678 = vmatprep.subr.mxu0 0.0
        %679 = vmatpush1.msra.mxu0 0.0
        %680 = vmatprep.subr.mxu0 0.0
        %681 = vmatpush1.msra.mxu0 0.0
        %682 = vmatprep.subr.mxu0 0.0
        %683 = vmatpush1.msra.mxu0 0.0
        %684 = vmatprep.subr.mxu0 0.0
        %685 = vmatpush1.msra.mxu0 0.0
        %686 = vmatprep.subr.mxu0 0.0
        %687 = vmatpush1.msra.mxu0 0.0
        %688 = vmatprep.mubr.f32.mxu0 0.0
        %689 = vmatmul.mubr.f32.gmra.mrb[0].mxu0 %v619
        %v690 = vpop.f32.mrb[0].mxu0
        %v691 = vadd.f32 0.0, %v690
        %v692 = vpop.f32.mrb[0].mxu0
        %693 = vmatprep.mubr.f32.mxu0 0.0
        %694 = vmatmul.mubr.f32.gmra.mrb[0].mxu0 %v622
        %v695 = vpop.f32.mrb[0].mxu0
        %v696 = vadd.f32 0.0, %v695
        %v697 = vpop.f32.mrb[0].mxu0
        %698 = vdwg.mxu0
        %v700 = vsel %vm255, %v274, 0
        %v703 = vsel %vm255, %v275, 0
        %705 = vmatprep.subr.mxu0 0.0
        %706 = vmatpush1.msra.mxu0 %v277
        %707 = vmatprep.subr.mxu0 0.0
        %708 = vmatpush1.msra.mxu0 %v278
        %709 = vmatprep.subr.mxu0 0.0
        %710 = vmatpush1.msra.mxu0 0.0
        %711 = vmatprep.subr.mxu0 0.0
        %712 = vmatpush1.msra.mxu0 0.0
        %713 = vmatprep.subr.mxu0 0.0
        %714 = vmatpush1.msra.mxu0 0.0
        %715 = vmatprep.subr.mxu0 0.0
        %716 = vmatpush1.msra.mxu0 0.0
        %717 = vmatprep.subr.mxu0 0.0
        %718 = vmatpush1.msra.mxu0 0.0
        %719 = vmatprep.subr.mxu0 0.0
        %720 = vmatpush1.msra.mxu0 0.0
        %721 = vmatprep.subr.mxu0 0.0
        %722 = vmatpush1.msra.mxu0 0.0
        %723 = vmatprep.subr.mxu0 0.0
        %724 = vmatpush1.msra.mxu0 0.0
        %725 = vmatprep.subr.mxu0 0.0
        %726 = vmatpush1.msra.mxu0 0.0
        %727 = vmatprep.subr.mxu0 0.0
        %728 = vmatpush1.msra.mxu0 0.0
        %729 = vmatprep.subr.mxu0 0.0
        %730 = vmatpush1.msra.mxu0 0.0
        %731 = vmatprep.subr.mxu0 0.0
        %732 = vmatpush1.msra.mxu0 0.0
        %733 = vmatprep.subr.mxu0 0.0
        %734 = vmatpush1.msra.mxu0 0.0
        %735 = vmatprep.subr.mxu0 0.0
        %736 = vmatpush1.msra.mxu0 0.0
        %737 = vmatprep.subr.mxu0 0.0
        %738 = vmatpush1.msra.mxu0 0.0
        %739 = vmatprep.subr.mxu0 0.0
        %740 = vmatpush1.msra.mxu0 0.0
        %741 = vmatprep.subr.mxu0 0.0
        %742 = vmatpush1.msra.mxu0 0.0
        %743 = vmatprep.subr.mxu0 0.0
        %744 = vmatpush1.msra.mxu0 0.0
        %745 = vmatprep.subr.mxu0 0.0
        %746 = vmatpush1.msra.mxu0 0.0
        %747 = vmatprep.subr.mxu0 0.0
        %748 = vmatpush1.msra.mxu0 0.0
        %749 = vmatprep.subr.mxu0 0.0
        %750 = vmatpush1.msra.mxu0 0.0
        %751 = vmatprep.subr.mxu0 0.0
        %752 = vmatpush1.msra.mxu0 0.0
        %753 = vmatprep.subr.mxu0 0.0
        %754 = vmatpush1.msra.mxu0 0.0
        %755 = vmatprep.subr.mxu0 0.0
        %756 = vmatpush1.msra.mxu0 0.0
        %757 = vmatprep.subr.mxu0 0.0
        %758 = vmatpush1.msra.mxu0 0.0
        %759 = vmatprep.subr.mxu0 0.0
        %760 = vmatpush1.msra.mxu0 0.0
        %761 = vmatprep.subr.mxu0 0.0
        %762 = vmatpush1.msra.mxu0 0.0
        %763 = vmatprep.subr.mxu0 0.0
        %764 = vmatpush1.msra.mxu0 0.0
        %765 = vmatprep.subr.mxu0 0.0
        %766 = vmatpush1.msra.mxu0 0.0
        %767 = vmatprep.subr.mxu0 0.0
        %768 = vmatpush1.msra.mxu0 0.0
        %769 = vmatprep.mubr.f32.mxu0 0.0
        %770 = vmatmul.mubr.f32.gmra.mrb[0].mxu0 %v700
        %v771 = vpop.f32.mrb[0].mxu0
        %v772 = vadd.f32 %v691, %v771
        %v773 = vpop.f32.mrb[0].mxu0
        %774 = vmatprep.mubr.f32.mxu0 0.0
        %775 = vmatmul.mubr.f32.gmra.mrb[0].mxu0 %v703
        %v776 = vpop.f32.mrb[0].mxu0
        %v777 = vadd.f32 %v696, %v776
        %v778 = vpop.f32.mrb[0].mxu0
        %779 = vdwg.mxu0
        %v780 = vld [vmem:[#allocation2 + $0x6] sm:$0xff]
        %v781 = vld [vmem:[#allocation2 + $0xe] sm:$0xff]
        %s782 = scalar_lea.vmem [#allocation5], 96
        %v783 = vld [vmem:[%s782] sm:$0xff]
        %v784 = vld [vmem:[%s782 + $0x8] sm:$0xff]
        %v786 = vsel %vm255, %v780, 0
        %v789 = vsel %vm255, %v781, 0
        %791 = vmatprep.subr.mxu0 0.0
        %792 = vmatpush1.msra.mxu0 %v783
        %793 = vmatprep.subr.mxu0 0.0
        %794 = vmatpush1.msra.mxu0 %v784
        %795 = vmatprep.subr.mxu0 0.0
        %796 = vmatpush1.msra.mxu0 0.0
        %797 = vmatprep.subr.mxu0 0.0
        %798 = vmatpush1.msra.mxu0 0.0
        %799 = vmatprep.subr.mxu0 0.0
        %800 = vmatpush1.msra.mxu0 0.0
        %801 = vmatprep.subr.mxu0 0.0
        %802 = vmatpush1.msra.mxu0 0.0
        %803 = vmatprep.subr.mxu0 0.0
        %804 = vmatpush1.msra.mxu0 0.0
        %805 = vmatprep.subr.mxu0 0.0
        %806 = vmatpush1.msra.mxu0 0.0
        %807 = vmatprep.subr.mxu0 0.0
        %808 = vmatpush1.msra.mxu0 0.0
        %809 = vmatprep.subr.mxu0 0.0
        %810 = vmatpush1.msra.mxu0 0.0
        %811 = vmatprep.subr.mxu0 0.0
        %812 = vmatpush1.msra.mxu0 0.0
        %813 = vmatprep.subr.mxu0 0.0
        %814 = vmatpush1.msra.mxu0 0.0
        %815 = vmatprep.subr.mxu0 0.0
        %816 = vmatpush1.msra.mxu0 0.0
        %817 = vmatprep.subr.mxu0 0.0
        %818 = vmatpush1.msra.mxu0 0.0
        %819 = vmatprep.subr.mxu0 0.0
        %820 = vmatpush1.msra.mxu0 0.0
        %821 = vmatprep.subr.mxu0 0.0
        %822 = vmatpush1.msra.mxu0 0.0
        %823 = vmatprep.subr.mxu0 0.0
        %824 = vmatpush1.msra.mxu0 0.0
        %825 = vmatprep.subr.mxu0 0.0
        %826 = vmatpush1.msra.mxu0 0.0
        %827 = vmatprep.subr.mxu0 0.0
        %828 = vmatpush1.msra.mxu0 0.0
        %829 = vmatprep.subr.mxu0 0.0
        %830 = vmatpush1.msra.mxu0 0.0
        %831 = vmatprep.subr.mxu0 0.0
        %832 = vmatpush1.msra.mxu0 0.0
        %833 = vmatprep.subr.mxu0 0.0
        %834 = vmatpush1.msra.mxu0 0.0
        %835 = vmatprep.subr.mxu0 0.0
        %836 = vmatpush1.msra.mxu0 0.0
        %837 = vmatprep.subr.mxu0 0.0
        %838 = vmatpush1.msra.mxu0 0.0
        %839 = vmatprep.subr.mxu0 0.0
        %840 = vmatpush1.msra.mxu0 0.0
        %841 = vmatprep.subr.mxu0 0.0
        %842 = vmatpush1.msra.mxu0 0.0
        %843 = vmatprep.subr.mxu0 0.0
        %844 = vmatpush1.msra.mxu0 0.0
        %845 = vmatprep.subr.mxu0 0.0
        %846 = vmatpush1.msra.mxu0 0.0
        %847 = vmatprep.subr.mxu0 0.0
        %848 = vmatpush1.msra.mxu0 0.0
        %849 = vmatprep.subr.mxu0 0.0
        %850 = vmatpush1.msra.mxu0 0.0
        %851 = vmatprep.subr.mxu0 0.0
        %852 = vmatpush1.msra.mxu0 0.0
        %853 = vmatprep.subr.mxu0 0.0
        %854 = vmatpush1.msra.mxu0 0.0
        %855 = vmatprep.mubr.f32.mxu0 0.0
        %856 = vmatmul.mubr.f32.gmra.mrb[0].mxu0 %v786
        %v857 = vpop.f32.mrb[0].mxu0
        %v858 = vadd.f32 0.0, %v857
        %v859 = vpop.f32.mrb[0].mxu0
        %860 = vmatprep.mubr.f32.mxu0 0.0
        %861 = vmatmul.mubr.f32.gmra.mrb[0].mxu0 %v789
        %v862 = vpop.f32.mrb[0].mxu0
        %v863 = vadd.f32 0.0, %v862
        %v864 = vpop.f32.mrb[0].mxu0
        %865 = vdwg.mxu0
        %v866 = vadd.f32 %v438, %v858
        %v867 = vadd.f32 %v443, %v863
        %v868 = vld [vmem:[#allocation2 + $0x7] sm:$0xff]
        %v869 = vld [vmem:[#allocation2 + $0xf] sm:$0xff]
        %s870 = scalar_lea.vmem [#allocation5], 112
        %v871 = vld [vmem:[%s870] sm:$0xff]
        %v872 = vld [vmem:[%s870 + $0x8] sm:$0xff]
        %v874 = vsel %vm255, %v868, 0
        %v877 = vsel %vm255, %v869, 0
        %879 = vmatprep.subr.mxu0 0.0
        %880 = vmatpush1.msra.mxu0 %v871
        %881 = vmatprep.subr.mxu0 0.0
        %882 = vmatpush1.msra.mxu0 %v872
        %883 = vmatprep.subr.mxu0 0.0
        %884 = vmatpush1.msra.mxu0 0.0
        %885 = vmatprep.subr.mxu0 0.0
        %886 = vmatpush1.msra.mxu0 0.0
        %887 = vmatprep.subr.mxu0 0.0
        %888 = vmatpush1.msra.mxu0 0.0
        %889 = vmatprep.subr.mxu0 0.0
        %890 = vmatpush1.msra.mxu0 0.0
        %891 = vmatprep.subr.mxu0 0.0
        %892 = vmatpush1.msra.mxu0 0.0
        %893 = vmatprep.subr.mxu0 0.0
        %894 = vmatpush1.msra.mxu0 0.0
        %895 = vmatprep.subr.mxu0 0.0
        %896 = vmatpush1.msra.mxu0 0.0
        %897 = vmatprep.subr.mxu0 0.0
        %898 = vmatpush1.msra.mxu0 0.0
        %899 = vmatprep.subr.mxu0 0.0
        %900 = vmatpush1.msra.mxu0 0.0
        %901 = vmatprep.subr.mxu0 0.0
        %902 = vmatpush1.msra.mxu0 0.0
        %903 = vmatprep.subr.mxu0 0.0
        %904 = vmatpush1.msra.mxu0 0.0
        %905 = vmatprep.subr.mxu0 0.0
        %906 = vmatpush1.msra.mxu0 0.0
        %907 = vmatprep.subr.mxu0 0.0
        %908 = vmatpush1.msra.mxu0 0.0
        %909 = vmatprep.subr.mxu0 0.0
        %910 = vmatpush1.msra.mxu0 0.0
        %911 = vmatprep.subr.mxu0 0.0
        %912 = vmatpush1.msra.mxu0 0.0
        %913 = vmatprep.subr.mxu0 0.0
        %914 = vmatpush1.msra.mxu0 0.0
        %915 = vmatprep.subr.mxu0 0.0
        %916 = vmatpush1.msra.mxu0 0.0
        %917 = vmatprep.subr.mxu0 0.0
        %918 = vmatpush1.msra.mxu0 0.0
        %919 = vmatprep.subr.mxu0 0.0
        %920 = vmatpush1.msra.mxu0 0.0
        %921 = vmatprep.subr.mxu0 0.0
        %922 = vmatpush1.msra.mxu0 0.0
        %923 = vmatprep.subr.mxu0 0.0
        %924 = vmatpush1.msra.mxu0 0.0
        %925 = vmatprep.subr.mxu0 0.0
        %926 = vmatpush1.msra.mxu0 0.0
        %927 = vmatprep.subr.mxu0 0.0
        %928 = vmatpush1.msra.mxu0 0.0
        %929 = vmatprep.subr.mxu0 0.0
        %930 = vmatpush1.msra.mxu0 0.0
        %931 = vmatprep.subr.mxu0 0.0
        %932 = vmatpush1.msra.mxu0 0.0
        %933 = vmatprep.subr.mxu0 0.0
        %934 = vmatpush1.msra.mxu0 0.0
        %935 = vmatprep.subr.mxu0 0.0
        %936 = vmatpush1.msra.mxu0 0.0
        %937 = vmatprep.subr.mxu0 0.0
        %938 = vmatpush1.msra.mxu0 0.0
        %939 = vmatprep.subr.mxu0 0.0
        %940 = vmatpush1.msra.mxu0 0.0
        %941 = vmatprep.subr.mxu0 0.0
        %942 = vmatpush1.msra.mxu0 0.0
        %943 = vmatprep.mubr.f32.mxu0 0.0
        %944 = vmatmul.mubr.f32.gmra.mrb[0].mxu0 %v874
        %v945 = vpop.f32.mrb[0].mxu0
        %v946 = vadd.f32 0.0, %v945
        %v947 = vpop.f32.mrb[0].mxu0
        %948 = vmatprep.mubr.f32.mxu0 0.0
        %949 = vmatmul.mubr.f32.gmra.mrb[0].mxu0 %v877
        %v950 = vpop.f32.mrb[0].mxu0
        %v951 = vadd.f32 0.0, %v950
        %v952 = vpop.f32.mrb[0].mxu0
        %953 = vdwg.mxu0
        %v954 = vadd.f32 %v605, %v946
        %v955 = vadd.f32 %v610, %v951
        %v956 = vld [vmem:[#allocation2 + $0x8] sm:$0xff]
        %v957 = vld [vmem:[#allocation2 + $0x10] sm:$0xff]
        %s958 = scalar_lea.vmem [#allocation5], 128
        %v959 = vld [vmem:[%s958] sm:$0xff]
        %v960 = vld [vmem:[%s958 + $0x8] sm:$0xff]
        %v962 = vsel %vm255, %v956, 0
        %v965 = vsel %vm255, %v957, 0
        %967 = vmatprep.subr.mxu0 0.0
        %968 = vmatpush1.msra.mxu0 %v959
        %969 = vmatprep.subr.mxu0 0.0
        %970 = vmatpush1.msra.mxu0 %v960
        %971 = vmatprep.subr.mxu0 0.0
        %972 = vmatpush1.msra.mxu0 0.0
        %973 = vmatprep.subr.mxu0 0.0
        %974 = vmatpush1.msra.mxu0 0.0
        %975 = vmatprep.subr.mxu0 0.0
        %976 = vmatpush1.msra.mxu0 0.0
        %977 = vmatprep.subr.mxu0 0.0
        %978 = vmatpush1.msra.mxu0 0.0
        %979 = vmatprep.subr.mxu0 0.0
        %980 = vmatpush1.msra.mxu0 0.0
        %981 = vmatprep.subr.mxu0 0.0
        %982 = vmatpush1.msra.mxu0 0.0
        %983 = vmatprep.subr.mxu0 0.0
        %984 = vmatpush1.msra.mxu0 0.0
        %985 = vmatprep.subr.mxu0 0.0
        %986 = vmatpush1.msra.mxu0 0.0
        %987 = vmatprep.subr.mxu0 0.0
        %988 = vmatpush1.msra.mxu0 0.0
        %989 = vmatprep.subr.mxu0 0.0
        %990 = vmatpush1.msra.mxu0 0.0
        %991 = vmatprep.subr.mxu0 0.0
        %992 = vmatpush1.msra.mxu0 0.0
        %993 = vmatprep.subr.mxu0 0.0
        %994 = vmatpush1.msra.mxu0 0.0
        %995 = vmatprep.subr.mxu0 0.0
        %996 = vmatpush1.msra.mxu0 0.0
        %997 = vmatprep.subr.mxu0 0.0
        %998 = vmatpush1.msra.mxu0 0.0
        %999 = vmatprep.subr.mxu0 0.0
        %1000 = vmatpush1.msra.mxu0 0.0
        %1001 = vmatprep.subr.mxu0 0.0
        %1002 = vmatpush1.msra.mxu0 0.0
        %1003 = vmatprep.subr.mxu0 0.0
        %1004 = vmatpush1.msra.mxu0 0.0
        %1005 = vmatprep.subr.mxu0 0.0
        %1006 = vmatpush1.msra.mxu0 0.0
        %1007 = vmatprep.subr.mxu0 0.0
        %1008 = vmatpush1.msra.mxu0 0.0
        %1009 = vmatprep.subr.mxu0 0.0
        %1010 = vmatpush1.msra.mxu0 0.0
        %1011 = vmatprep.subr.mxu0 0.0
        %1012 = vmatpush1.msra.mxu0 0.0
        %1013 = vmatprep.subr.mxu0 0.0
        %1014 = vmatpush1.msra.mxu0 0.0
        %1015 = vmatprep.subr.mxu0 0.0
        %1016 = vmatpush1.msra.mxu0 0.0
        %1017 = vmatprep.subr.mxu0 0.0
        %1018 = vmatpush1.msra.mxu0 0.0
        %1019 = vmatprep.subr.mxu0 0.0
        %1020 = vmatpush1.msra.mxu0 0.0
        %1021 = vmatprep.subr.mxu0 0.0
        %1022 = vmatpush1.msra.mxu0 0.0
        %1023 = vmatprep.subr.mxu0 0.0
        %1024 = vmatpush1.msra.mxu0 0.0
        %1025 = vmatprep.subr.mxu0 0.0
        %1026 = vmatpush1.msra.mxu0 0.0
        %1027 = vmatprep.subr.mxu0 0.0
        %1028 = vmatpush1.msra.mxu0 0.0
        %1029 = vmatprep.subr.mxu0 0.0
        %1030 = vmatpush1.msra.mxu0 0.0
        %1031 = vmatprep.mubr.f32.mxu0 0.0
        %1032 = vmatmul.mubr.f32.gmra.mrb[0].mxu0 %v962
        %v1033 = vpop.f32.mrb[0].mxu0
        %v1034 = vadd.f32 0.0, %v1033
        %v1035 = vpop.f32.mrb[0].mxu0
        %1036 = vmatprep.mubr.f32.mxu0 0.0
        %1037 = vmatmul.mubr.f32.gmra.mrb[0].mxu0 %v965
        %v1038 = vpop.f32.mrb[0].mxu0
        %v1039 = vadd.f32 0.0, %v1038
        %v1040 = vpop.f32.mrb[0].mxu0
        %1041 = vdwg.mxu0
        %v1042 = vadd.f32 %v772, %v1034
        %v1043 = vadd.f32 %v777, %v1039
        %v1044 = vld [vmem:[#allocation2 + $0x9] sm:$0xff]
        %v1045 = vld [vmem:[#allocation2 + $0x11] sm:$0xff]
        %s1046 = scalar_lea.vmem [#allocation5], 144
        %v1047 = vld [vmem:[%s1046] sm:$0xff]
        %v1048 = vld [vmem:[%s1046 + $0x8] sm:$0xff]
        %v1050 = vsel %vm255, %v1044, 0
        %v1053 = vsel %vm255, %v1045, 0
        %1055 = vmatprep.subr.mxu0 0.0
        %1056 = vmatpush1.msra.mxu0 %v1047
        %1057 = vmatprep.subr.mxu0 0.0
        %1058 = vmatpush1.msra.mxu0 %v1048
        %1059 = vmatprep.subr.mxu0 0.0
        %1060 = vmatpush1.msra.mxu0 0.0
        %1061 = vmatprep.subr.mxu0 0.0
        %1062 = vmatpush1.msra.mxu0 0.0
        %1063 = vmatprep.subr.mxu0 0.0
        %1064 = vmatpush1.msra.mxu0 0.0
        %1065 = vmatprep.subr.mxu0 0.0
        %1066 = vmatpush1.msra.mxu0 0.0
        %1067 = vmatprep.subr.mxu0 0.0
        %1068 = vmatpush1.msra.mxu0 0.0
        %1069 = vmatprep.subr.mxu0 0.0
        %1070 = vmatpush1.msra.mxu0 0.0
        %1071 = vmatprep.subr.mxu0 0.0
        %1072 = vmatpush1.msra.mxu0 0.0
        %1073 = vmatprep.subr.mxu0 0.0
        %1074 = vmatpush1.msra.mxu0 0.0
        %1075 = vmatprep.subr.mxu0 0.0
        %1076 = vmatpush1.msra.mxu0 0.0
        %1077 = vmatprep.subr.mxu0 0.0
        %1078 = vmatpush1.msra.mxu0 0.0
        %1079 = vmatprep.subr.mxu0 0.0
        %1080 = vmatpush1.msra.mxu0 0.0
        %1081 = vmatprep.subr.mxu0 0.0
        %1082 = vmatpush1.msra.mxu0 0.0
        %1083 = vmatprep.subr.mxu0 0.0
        %1084 = vmatpush1.msra.mxu0 0.0
        %1085 = vmatprep.subr.mxu0 0.0
        %1086 = vmatpush1.msra.mxu0 0.0
        %1087 = vmatprep.subr.mxu0 0.0
        %1088 = vmatpush1.msra.mxu0 0.0
        %1089 = vmatprep.subr.mxu0 0.0
        %1090 = vmatpush1.msra.mxu0 0.0
        %1091 = vmatprep.subr.mxu0 0.0
        %1092 = vmatpush1.msra.mxu0 0.0
        %1093 = vmatprep.subr.mxu0 0.0
        %1094 = vmatpush1.msra.mxu0 0.0
        %1095 = vmatprep.subr.mxu0 0.0
        %1096 = vmatpush1.msra.mxu0 0.0
        %1097 = vmatprep.subr.mxu0 0.0
        %1098 = vmatpush1.msra.mxu0 0.0
        %1099 = vmatprep.subr.mxu0 0.0
        %1100 = vmatpush1.msra.mxu0 0.0
        %1101 = vmatprep.subr.mxu0 0.0
        %1102 = vmatpush1.msra.mxu0 0.0
        %1103 = vmatprep.subr.mxu0 0.0
        %1104 = vmatpush1.msra.mxu0 0.0
        %1105 = vmatprep.subr.mxu0 0.0
        %1106 = vmatpush1.msra.mxu0 0.0
        %1107 = vmatprep.subr.mxu0 0.0
        %1108 = vmatpush1.msra.mxu0 0.0
        %1109 = vmatprep.subr.mxu0 0.0
        %1110 = vmatpush1.msra.mxu0 0.0
        %1111 = vmatprep.subr.mxu0 0.0
        %1112 = vmatpush1.msra.mxu0 0.0
        %1113 = vmatprep.subr.mxu0 0.0
        %1114 = vmatpush1.msra.mxu0 0.0
        %1115 = vmatprep.subr.mxu0 0.0
        %1116 = vmatpush1.msra.mxu0 0.0
        %1117 = vmatprep.subr.mxu0 0.0
        %1118 = vmatpush1.msra.mxu0 0.0
        %1119 = vmatprep.mubr.f32.mxu0 0.0
        %1120 = vmatmul.mubr.f32.gmra.mrb[0].mxu0 %v1050
        %v1121 = vpop.f32.mrb[0].mxu0
        %v1122 = vadd.f32 0.0, %v1121
        %v1123 = vpop.f32.mrb[0].mxu0
        %1124 = vmatprep.mubr.f32.mxu0 0.0
        %1125 = vmatmul.mubr.f32.gmra.mrb[0].mxu0 %v1053
        %v1126 = vpop.f32.mrb[0].mxu0
        %v1127 = vadd.f32 0.0, %v1126
        %v1128 = vpop.f32.mrb[0].mxu0
        %1129 = vdwg.mxu0
        %v1130 = vadd.f32 %v866, %v1122
        %v1131 = vadd.f32 %v867, %v1127
        %v1132 = vld [vmem:[#allocation2 + $0xa] sm:$0xff]
        %v1133 = vld [vmem:[#allocation2 + $0x12] sm:$0xff]
        %s1134 = scalar_lea.vmem [#allocation5], 160
        %v1135 = vld [vmem:[%s1134] sm:$0xff]
        %v1136 = vld [vmem:[%s1134 + $0x8] sm:$0xff]
        %v1138 = vsel %vm255, %v1132, 0
        %v1141 = vsel %vm255, %v1133, 0
        %1143 = vmatprep.subr.mxu0 0.0
        %1144 = vmatpush1.msra.mxu0 %v1135
        %1145 = vmatprep.subr.mxu0 0.0
        %1146 = vmatpush1.msra.mxu0 %v1136
        %1147 = vmatprep.subr.mxu0 0.0
        %1148 = vmatpush1.msra.mxu0 0.0
        %1149 = vmatprep.subr.mxu0 0.0
        %1150 = vmatpush1.msra.mxu0 0.0
        %1151 = vmatprep.subr.mxu0 0.0
        %1152 = vmatpush1.msra.mxu0 0.0
        %1153 = vmatprep.subr.mxu0 0.0
        %1154 = vmatpush1.msra.mxu0 0.0
        %1155 = vmatprep.subr.mxu0 0.0
        %1156 = vmatpush1.msra.mxu0 0.0
        %1157 = vmatprep.subr.mxu0 0.0
        %1158 = vmatpush1.msra.mxu0 0.0
        %1159 = vmatprep.subr.mxu0 0.0
        %1160 = vmatpush1.msra.mxu0 0.0
        %1161 = vmatprep.subr.mxu0 0.0
        %1162 = vmatpush1.msra.mxu0 0.0
        %1163 = vmatprep.subr.mxu0 0.0
        %1164 = vmatpush1.msra.mxu0 0.0
        %1165 = vmatprep.subr.mxu0 0.0
        %1166 = vmatpush1.msra.mxu0 0.0
        %1167 = vmatprep.subr.mxu0 0.0
        %1168 = vmatpush1.msra.mxu0 0.0
        %1169 = vmatprep.subr.mxu0 0.0
        %1170 = vmatpush1.msra.mxu0 0.0
        %1171 = vmatprep.subr.mxu0 0.0
        %1172 = vmatpush1.msra.mxu0 0.0
        %1173 = vmatprep.subr.mxu0 0.0
        %1174 = vmatpush1.msra.mxu0 0.0
        %1175 = vmatprep.subr.mxu0 0.0
        %1176 = vmatpush1.msra.mxu0 0.0
        %1177 = vmatprep.subr.mxu0 0.0
        %1178 = vmatpush1.msra.mxu0 0.0
        %1179 = vmatprep.subr.mxu0 0.0
        %1180 = vmatpush1.msra.mxu0 0.0
        %1181 = vmatprep.subr.mxu0 0.0
        %1182 = vmatpush1.msra.mxu0 0.0
        %1183 = vmatprep.subr.mxu0 0.0
        %1184 = vmatpush1.msra.mxu0 0.0
        %1185 = vmatprep.subr.mxu0 0.0
        %1186 = vmatpush1.msra.mxu0 0.0
        %1187 = vmatprep.subr.mxu0 0.0
        %1188 = vmatpush1.msra.mxu0 0.0
        %1189 = vmatprep.subr.mxu0 0.0
        %1190 = vmatpush1.msra.mxu0 0.0
        %1191 = vmatprep.subr.mxu0 0.0
        %1192 = vmatpush1.msra.mxu0 0.0
        %1193 = vmatprep.subr.mxu0 0.0
        %1194 = vmatpush1.msra.mxu0 0.0
        %1195 = vmatprep.subr.mxu0 0.0
        %1196 = vmatpush1.msra.mxu0 0.0
        %1197 = vmatprep.subr.mxu0 0.0
        %1198 = vmatpush1.msra.mxu0 0.0
        %1199 = vmatprep.subr.mxu0 0.0
        %1200 = vmatpush1.msra.mxu0 0.0
        %1201 = vmatprep.subr.mxu0 0.0
        %1202 = vmatpush1.msra.mxu0 0.0
        %1203 = vmatprep.subr.mxu0 0.0
        %1204 = vmatpush1.msra.mxu0 0.0
        %1205 = vmatprep.subr.mxu0 0.0
        %1206 = vmatpush1.msra.mxu0 0.0
        %1207 = vmatprep.mubr.f32.mxu0 0.0
        %1208 = vmatmul.mubr.f32.gmra.mrb[0].mxu0 %v1138
        %v1209 = vpop.f32.mrb[0].mxu0
        %v1210 = vadd.f32 0.0, %v1209
        %v1211 = vpop.f32.mrb[0].mxu0
        %1212 = vmatprep.mubr.f32.mxu0 0.0
        %1213 = vmatmul.mubr.f32.gmra.mrb[0].mxu0 %v1141
        %v1214 = vpop.f32.mrb[0].mxu0
        %v1215 = vadd.f32 0.0, %v1214
        %v1216 = vpop.f32.mrb[0].mxu0
        %1217 = vdwg.mxu0
        %v1218 = vadd.f32 %v954, %v1210
        %v1219 = vadd.f32 %v955, %v1215
        %v1220 = vld [vmem:[#allocation2 + $0xb] sm:$0xff]
        %v1221 = vld [vmem:[#allocation2 + $0x13] sm:$0xff]
        %s1222 = scalar_lea.vmem [#allocation5], 176
        %v1223 = vld [vmem:[%s1222] sm:$0xff]
        %v1224 = vld [vmem:[%s1222 + $0x8] sm:$0xff]
        %v1226 = vsel %vm255, %v1220, 0
        %v1229 = vsel %vm255, %v1221, 0
        %1231 = vmatprep.subr.mxu0 0.0
        %1232 = vmatpush1.msra.mxu0 %v1223
        %1233 = vmatprep.subr.mxu0 0.0
        %1234 = vmatpush1.msra.mxu0 %v1224
        %1235 = vmatprep.subr.mxu0 0.0
        %1236 = vmatpush1.msra.mxu0 0.0
        %1237 = vmatprep.subr.mxu0 0.0
        %1238 = vmatpush1.msra.mxu0 0.0
        %1239 = vmatprep.subr.mxu0 0.0
        %1240 = vmatpush1.msra.mxu0 0.0
        %1241 = vmatprep.subr.mxu0 0.0
        %1242 = vmatpush1.msra.mxu0 0.0
        %1243 = vmatprep.subr.mxu0 0.0
        %1244 = vmatpush1.msra.mxu0 0.0
        %1245 = vmatprep.subr.mxu0 0.0
        %1246 = vmatpush1.msra.mxu0 0.0
        %1247 = vmatprep.subr.mxu0 0.0
        %1248 = vmatpush1.msra.mxu0 0.0
        %1249 = vmatprep.subr.mxu0 0.0
        %1250 = vmatpush1.msra.mxu0 0.0
        %1251 = vmatprep.subr.mxu0 0.0
        %1252 = vmatpush1.msra.mxu0 0.0
        %1253 = vmatprep.subr.mxu0 0.0
        %1254 = vmatpush1.msra.mxu0 0.0
        %1255 = vmatprep.subr.mxu0 0.0
        %1256 = vmatpush1.msra.mxu0 0.0
        %1257 = vmatprep.subr.mxu0 0.0
        %1258 = vmatpush1.msra.mxu0 0.0
        %1259 = vmatprep.subr.mxu0 0.0
        %1260 = vmatpush1.msra.mxu0 0.0
        %1261 = vmatprep.subr.mxu0 0.0
        %1262 = vmatpush1.msra.mxu0 0.0
        %1263 = vmatprep.subr.mxu0 0.0
        %1264 = vmatpush1.msra.mxu0 0.0
        %1265 = vmatprep.subr.mxu0 0.0
        %1266 = vmatpush1.msra.mxu0 0.0
        %1267 = vmatprep.subr.mxu0 0.0
        %1268 = vmatpush1.msra.mxu0 0.0
        %1269 = vmatprep.subr.mxu0 0.0
        %1270 = vmatpush1.msra.mxu0 0.0
        %1271 = vmatprep.subr.mxu0 0.0
        %1272 = vmatpush1.msra.mxu0 0.0
        %1273 = vmatprep.subr.mxu0 0.0
        %1274 = vmatpush1.msra.mxu0 0.0
        %1275 = vmatprep.subr.mxu0 0.0
        %1276 = vmatpush1.msra.mxu0 0.0
        %1277 = vmatprep.subr.mxu0 0.0
        %1278 = vmatpush1.msra.mxu0 0.0
        %1279 = vmatprep.subr.mxu0 0.0
        %1280 = vmatpush1.msra.mxu0 0.0
        %1281 = vmatprep.subr.mxu0 0.0
        %1282 = vmatpush1.msra.mxu0 0.0
        %1283 = vmatprep.subr.mxu0 0.0
        %1284 = vmatpush1.msra.mxu0 0.0
        %1285 = vmatprep.subr.mxu0 0.0
        %1286 = vmatpush1.msra.mxu0 0.0
        %1287 = vmatprep.subr.mxu0 0.0
        %1288 = vmatpush1.msra.mxu0 0.0
        %1289 = vmatprep.subr.mxu0 0.0
        %1290 = vmatpush1.msra.mxu0 0.0
        %1291 = vmatprep.subr.mxu0 0.0
        %1292 = vmatpush1.msra.mxu0 0.0
        %1293 = vmatprep.subr.mxu0 0.0
        %1294 = vmatpush1.msra.mxu0 0.0
        %1295 = vmatprep.mubr.f32.mxu0 0.0
        %1296 = vmatmul.mubr.f32.gmra.mrb[0].mxu0 %v1226
        %v1297 = vpop.f32.mrb[0].mxu0
        %v1298 = vadd.f32 0.0, %v1297
        %v1299 = vpop.f32.mrb[0].mxu0
        %1300 = vmatprep.mubr.f32.mxu0 0.0
        %1301 = vmatmul.mubr.f32.gmra.mrb[0].mxu0 %v1229
        %v1302 = vpop.f32.mrb[0].mxu0
        %v1303 = vadd.f32 0.0, %v1302
        %v1304 = vpop.f32.mrb[0].mxu0
        %1305 = vdwg.mxu0
        %v1306 = vadd.f32 %v1042, %v1298
        %v1307 = vadd.f32 %v1043, %v1303
        %v1308 = vld [vmem:[#allocation2 + $0xc] sm:$0xff]
        %v1309 = vld [vmem:[#allocation2 + $0x14] sm:$0xff]
        %s1310 = scalar_lea.vmem [#allocation5], 192
        %v1311 = vld [vmem:[%s1310] sm:$0xff]
        %v1312 = vld [vmem:[%s1310 + $0x8] sm:$0xff]
        %v1314 = vsel %vm255, %v1308, 0
        %v1317 = vsel %vm255, %v1309, 0
        %1319 = vmatprep.subr.mxu0 0.0
        %1320 = vmatpush1.msra.mxu0 %v1311
        %1321 = vmatprep.subr.mxu0 0.0
        %1322 = vmatpush1.msra.mxu0 %v1312
        %1323 = vmatprep.subr.mxu0 0.0
        %1324 = vmatpush1.msra.mxu0 0.0
        %1325 = vmatprep.subr.mxu0 0.0
        %1326 = vmatpush1.msra.mxu0 0.0
        %1327 = vmatprep.subr.mxu0 0.0
        %1328 = vmatpush1.msra.mxu0 0.0
        %1329 = vmatprep.subr.mxu0 0.0
        %1330 = vmatpush1.msra.mxu0 0.0
        %1331 = vmatprep.subr.mxu0 0.0
        %1332 = vmatpush1.msra.mxu0 0.0
        %1333 = vmatprep.subr.mxu0 0.0
        %1334 = vmatpush1.msra.mxu0 0.0
        %1335 = vmatprep.subr.mxu0 0.0
        %1336 = vmatpush1.msra.mxu0 0.0
        %1337 = vmatprep.subr.mxu0 0.0
        %1338 = vmatpush1.msra.mxu0 0.0
        %1339 = vmatprep.subr.mxu0 0.0
        %1340 = vmatpush1.msra.mxu0 0.0
        %1341 = vmatprep.subr.mxu0 0.0
        %1342 = vmatpush1.msra.mxu0 0.0
        %1343 = vmatprep.subr.mxu0 0.0
        %1344 = vmatpush1.msra.mxu0 0.0
        %1345 = vmatprep.subr.mxu0 0.0
        %1346 = vmatpush1.msra.mxu0 0.0
        %1347 = vmatprep.subr.mxu0 0.0
        %1348 = vmatpush1.msra.mxu0 0.0
        %1349 = vmatprep.subr.mxu0 0.0
        %1350 = vmatpush1.msra.mxu0 0.0
        %1351 = vmatprep.subr.mxu0 0.0
        %1352 = vmatpush1.msra.mxu0 0.0
        %1353 = vmatprep.subr.mxu0 0.0
        %1354 = vmatpush1.msra.mxu0 0.0
        %1355 = vmatprep.subr.mxu0 0.0
        %1356 = vmatpush1.msra.mxu0 0.0
        %1357 = vmatprep.subr.mxu0 0.0
        %1358 = vmatpush1.msra.mxu0 0.0
        %1359 = vmatprep.subr.mxu0 0.0
        %1360 = vmatpush1.msra.mxu0 0.0
        %1361 = vmatprep.subr.mxu0 0.0
        %1362 = vmatpush1.msra.mxu0 0.0
        %1363 = vmatprep.subr.mxu0 0.0
        %1364 = vmatpush1.msra.mxu0 0.0
        %1365 = vmatprep.subr.mxu0 0.0
        %1366 = vmatpush1.msra.mxu0 0.0
        %1367 = vmatprep.subr.mxu0 0.0
        %1368 = vmatpush1.msra.mxu0 0.0
        %1369 = vmatprep.subr.mxu0 0.0
        %1370 = vmatpush1.msra.mxu0 0.0
        %1371 = vmatprep.subr.mxu0 0.0
        %1372 = vmatpush1.msra.mxu0 0.0
        %1373 = vmatprep.subr.mxu0 0.0
        %1374 = vmatpush1.msra.mxu0 0.0
        %1375 = vmatprep.subr.mxu0 0.0
        %1376 = vmatpush1.msra.mxu0 0.0
        %1377 = vmatprep.subr.mxu0 0.0
        %1378 = vmatpush1.msra.mxu0 0.0
        %1379 = vmatprep.subr.mxu0 0.0
        %1380 = vmatpush1.msra.mxu0 0.0
        %1381 = vmatprep.subr.mxu0 0.0
        %1382 = vmatpush1.msra.mxu0 0.0
        %1383 = vmatprep.mubr.f32.mxu0 0.0
        %1384 = vmatmul.mubr.f32.gmra.mrb[0].mxu0 %v1314
        %v1385 = vpop.f32.mrb[0].mxu0
        %v1386 = vadd.f32 0.0, %v1385
        %v1387 = vpop.f32.mrb[0].mxu0
        %1388 = vmatprep.mubr.f32.mxu0 0.0
        %1389 = vmatmul.mubr.f32.gmra.mrb[0].mxu0 %v1317
        %v1390 = vpop.f32.mrb[0].mxu0
        %v1391 = vadd.f32 0.0, %v1390
        %v1392 = vpop.f32.mrb[0].mxu0
        %1393 = vdwg.mxu0
        %v1394 = vadd.f32 %v1130, %v1386
        %v1395 = vadd.f32 %v1131, %v1391
        %v1396 = vld [vmem:[#allocation2 + $0xd] sm:$0xff]
        %v1397 = vld [vmem:[#allocation2 + $0x15] sm:$0xff]
        %s1398 = scalar_lea.vmem [#allocation5], 208
        %v1399 = vld [vmem:[%s1398] sm:$0xff]
        %v1400 = vld [vmem:[%s1398 + $0x8] sm:$0xff]
        %v1402 = vsel %vm255, %v1396, 0
        %v1405 = vsel %vm255, %v1397, 0
        %1407 = vmatprep.subr.mxu0 0.0
        %1408 = vmatpush1.msra.mxu0 %v1399
        %1409 = vmatprep.subr.mxu0 0.0
        %1410 = vmatpush1.msra.mxu0 %v1400
        %1411 = vmatprep.subr.mxu0 0.0
        %1412 = vmatpush1.msra.mxu0 0.0
        %1413 = vmatprep.subr.mxu0 0.0
        %1414 = vmatpush1.msra.mxu0 0.0
        %1415 = vmatprep.subr.mxu0 0.0
        %1416 = vmatpush1.msra.mxu0 0.0
        %1417 = vmatprep.subr.mxu0 0.0
        %1418 = vmatpush1.msra.mxu0 0.0
        %1419 = vmatprep.subr.mxu0 0.0
        %1420 = vmatpush1.msra.mxu0 0.0
        %1421 = vmatprep.subr.mxu0 0.0
        %1422 = vmatpush1.msra.mxu0 0.0
        %1423 = vmatprep.subr.mxu0 0.0
        %1424 = vmatpush1.msra.mxu0 0.0
        %1425 = vmatprep.subr.mxu0 0.0
        %1426 = vmatpush1.msra.mxu0 0.0
        %1427 = vmatprep.subr.mxu0 0.0
        %1428 = vmatpush1.msra.mxu0 0.0
        %1429 = vmatprep.subr.mxu0 0.0
        %1430 = vmatpush1.msra.mxu0 0.0
        %1431 = vmatprep.subr.mxu0 0.0
        %1432 = vmatpush1.msra.mxu0 0.0
        %1433 = vmatprep.subr.mxu0 0.0
        %1434 = vmatpush1.msra.mxu0 0.0
        %1435 = vmatprep.subr.mxu0 0.0
        %1436 = vmatpush1.msra.mxu0 0.0
        %1437 = vmatprep.subr.mxu0 0.0
        %1438 = vmatpush1.msra.mxu0 0.0
        %1439 = vmatprep.subr.mxu0 0.0
        %1440 = vmatpush1.msra.mxu0 0.0
        %1441 = vmatprep.subr.mxu0 0.0
        %1442 = vmatpush1.msra.mxu0 0.0
        %1443 = vmatprep.subr.mxu0 0.0
        %1444 = vmatpush1.msra.mxu0 0.0
        %1445 = vmatprep.subr.mxu0 0.0
        %1446 = vmatpush1.msra.mxu0 0.0
        %1447 = vmatprep.subr.mxu0 0.0
        %1448 = vmatpush1.msra.mxu0 0.0
        %1449 = vmatprep.subr.mxu0 0.0
        %1450 = vmatpush1.msra.mxu0 0.0
        %1451 = vmatprep.subr.mxu0 0.0
        %1452 = vmatpush1.msra.mxu0 0.0
        %1453 = vmatprep.subr.mxu0 0.0
        %1454 = vmatpush1.msra.mxu0 0.0
        %1455 = vmatprep.subr.mxu0 0.0
        %1456 = vmatpush1.msra.mxu0 0.0
        %1457 = vmatprep.subr.mxu0 0.0
        %1458 = vmatpush1.msra.mxu0 0.0
        %1459 = vmatprep.subr.mxu0 0.0
        %1460 = vmatpush1.msra.mxu0 0.0
        %1461 = vmatprep.subr.mxu0 0.0
        %1462 = vmatpush1.msra.mxu0 0.0
        %1463 = vmatprep.subr.mxu0 0.0
        %1464 = vmatpush1.msra.mxu0 0.0
        %1465 = vmatprep.subr.mxu0 0.0
        %1466 = vmatpush1.msra.mxu0 0.0
        %1467 = vmatprep.subr.mxu0 0.0
        %1468 = vmatpush1.msra.mxu0 0.0
        %1469 = vmatprep.subr.mxu0 0.0
        %1470 = vmatpush1.msra.mxu0 0.0
        %1471 = vmatprep.mubr.f32.mxu0 0.0
        %1472 = vmatmul.mubr.f32.gmra.mrb[0].mxu0 %v1402
        %v1473 = vpop.f32.mrb[0].mxu0
        %v1474 = vadd.f32 0.0, %v1473
        %v1475 = vpop.f32.mrb[0].mxu0
        %1476 = vmatprep.mubr.f32.mxu0 0.0
        %1477 = vmatmul.mubr.f32.gmra.mrb[0].mxu0 %v1405
        %v1478 = vpop.f32.mrb[0].mxu0
        %v1479 = vadd.f32 0.0, %v1478
        %v1480 = vpop.f32.mrb[0].mxu0
        %1481 = vdwg.mxu0
        %v1482 = vadd.f32 %v1218, %v1474
        %v1483 = vadd.f32 %v1219, %v1479
        %v1484 = vld [vmem:[#allocation2 + $0xe] sm:$0xff]
        %v1485 = vld [vmem:[#allocation2 + $0x16] sm:$0xff]
        %s1486 = scalar_lea.vmem [#allocation5], 224
        %v1487 = vld [vmem:[%s1486] sm:$0xff]
        %v1488 = vld [vmem:[%s1486 + $0x8] sm:$0xff]
        %v1490 = vsel %vm255, %v1484, 0
        %v1493 = vsel %vm255, %v1485, 0
        %1495 = vmatprep.subr.mxu0 0.0
        %1496 = vmatpush1.msra.mxu0 %v1487
        %1497 = vmatprep.subr.mxu0 0.0
        %1498 = vmatpush1.msra.mxu0 %v1488
        %1499 = vmatprep.subr.mxu0 0.0
        %1500 = vmatpush1.msra.mxu0 0.0
        %1501 = vmatprep.subr.mxu0 0.0
        %1502 = vmatpush1.msra.mxu0 0.0
        %1503 = vmatprep.subr.mxu0 0.0
        %1504 = vmatpush1.msra.mxu0 0.0
        %1505 = vmatprep.subr.mxu0 0.0
        %1506 = vmatpush1.msra.mxu0 0.0
        %1507 = vmatprep.subr.mxu0 0.0
        %1508 = vmatpush1.msra.mxu0 0.0
        %1509 = vmatprep.subr.mxu0 0.0
        %1510 = vmatpush1.msra.mxu0 0.0
        %1511 = vmatprep.subr.mxu0 0.0
        %1512 = vmatpush1.msra.mxu0 0.0
        %1513 = vmatprep.subr.mxu0 0.0
        %1514 = vmatpush1.msra.mxu0 0.0
        %1515 = vmatprep.subr.mxu0 0.0
        %1516 = vmatpush1.msra.mxu0 0.0
        %1517 = vmatprep.subr.mxu0 0.0
        %1518 = vmatpush1.msra.mxu0 0.0
        %1519 = vmatprep.subr.mxu0 0.0
        %1520 = vmatpush1.msra.mxu0 0.0
        %1521 = vmatprep.subr.mxu0 0.0
        %1522 = vmatpush1.msra.mxu0 0.0
        %1523 = vmatprep.subr.mxu0 0.0
        %1524 = vmatpush1.msra.mxu0 0.0
        %1525 = vmatprep.subr.mxu0 0.0
        %1526 = vmatpush1.msra.mxu0 0.0
        %1527 = vmatprep.subr.mxu0 0.0
        %1528 = vmatpush1.msra.mxu0 0.0
        %1529 = vmatprep.subr.mxu0 0.0
        %1530 = vmatpush1.msra.mxu0 0.0
        %1531 = vmatprep.subr.mxu0 0.0
        %1532 = vmatpush1.msra.mxu0 0.0
        %1533 = vmatprep.subr.mxu0 0.0
        %1534 = vmatpush1.msra.mxu0 0.0
        %1535 = vmatprep.subr.mxu0 0.0
        %1536 = vmatpush1.msra.mxu0 0.0
        %1537 = vmatprep.subr.mxu0 0.0
        %1538 = vmatpush1.msra.mxu0 0.0
        %1539 = vmatprep.subr.mxu0 0.0
        %1540 = vmatpush1.msra.mxu0 0.0
        %1541 = vmatprep.subr.mxu0 0.0
        %1542 = vmatpush1.msra.mxu0 0.0
        %1543 = vmatprep.subr.mxu0 0.0
        %1544 = vmatpush1.msra.mxu0 0.0
        %1545 = vmatprep.subr.mxu0 0.0
        %1546 = vmatpush1.msra.mxu0 0.0
        %1547 = vmatprep.subr.mxu0 0.0
        %1548 = vmatpush1.msra.mxu0 0.0
        %1549 = vmatprep.subr.mxu0 0.0
        %1550 = vmatpush1.msra.mxu0 0.0
        %1551 = vmatprep.subr.mxu0 0.0
        %1552 = vmatpush1.msra.mxu0 0.0
        %1553 = vmatprep.subr.mxu0 0.0
        %1554 = vmatpush1.msra.mxu0 0.0
        %1555 = vmatprep.subr.mxu0 0.0
        %1556 = vmatpush1.msra.mxu0 0.0
        %1557 = vmatprep.subr.mxu0 0.0
        %1558 = vmatpush1.msra.mxu0 0.0
        %1559 = vmatprep.mubr.f32.mxu0 0.0
        %1560 = vmatmul.mubr.f32.gmra.mrb[0].mxu0 %v1490
        %v1561 = vpop.f32.mrb[0].mxu0
        %v1562 = vadd.f32 0.0, %v1561
        %v1563 = vpop.f32.mrb[0].mxu0
        %1564 = vmatprep.mubr.f32.mxu0 0.0
        %1565 = vmatmul.mubr.f32.gmra.mrb[0].mxu0 %v1493
        %v1566 = vpop.f32.mrb[0].mxu0
        %v1567 = vadd.f32 0.0, %v1566
        %v1568 = vpop.f32.mrb[0].mxu0
        %1569 = vdwg.mxu0
        %v1570 = vadd.f32 %v1306, %v1562
        %v1571 = vadd.f32 %v1307, %v1567
        %v1572 = vadd.f32 %v1394, %v1482
        %v1573 = vadd.f32 %v1395, %v1483
        %v1574 = vadd.f32 %v1572, %v1570
        %v1575 = vadd.f32 %v1573, %v1571
        %1576 = vst.msk [vmem:[%s245] sm:$0xff] %vm255, %v1574
        %1577 = vst.msk [vmem:[%s245 + $0x8] sm:$0xff] %vm255, %v1575
        %vm1578 = vcmp.ge.f32.partialorder %v1574, 0.6
        %vm1579 = vcmp.ge.f32.partialorder %v1575, 0.6
        %v1580 = vsel %vm1578, -inf, %v1574
        %v1581 = vsel %vm1579, -inf, %v1575
        %v1582 = vsel %vm255, %v1580, -inf
        %1583 = vmax.xlane.f32.xlu0 %v1582
        %v1584 = vpop.xlane.xlu0 %1583
        %v1585 = vsel %vm255, %v1581, -inf
        %1586 = vmax.xlane.f32.xlu0 %v1585
        %v1587 = vpop.xlane.xlu0 %1586
        %vm1588 = vcmask 7168
        %1589 = vst.msk [vmem:[%s254] sm:$0xff] %vm1588, %v1584
        %1590 = vst.msk [vmem:[%s254 + $0x8] sm:$0xff] %vm1588, %v1587
        %p1591 = scmp.lt.s32.totalorder %s23, 1
        %s1592 = scalar_select %p1591, %s23, 1
        %p1593 = scmp.lt.s32.totalorder %s24, 0
        %s1594 = scalar_select %p1593, %s24, 0
        %s1595 = smul.addr %s1594, 2
        %s1596 = smul.addr %s1592, 2
        %s1597 = sadd.s32 %s1595, %s1596
        %s1598 = smul.addr %s1597, 8
        %s1599 = scalar_lea.vmem %s2, %s1598
        %p1600 = scmp.lt.s32.totalorder %s23, 1
        %s1601 = scalar_select %p1600, %s23, 1
        %p1602 = scmp.lt.s32.totalorder %s24, 0
        %s1603 = scalar_select %p1602, %s24, 0
        %s1604 = smul.addr %s1603, 2
        %s1605 = smul.addr %s1601, 2
        %s1606 = sadd.s32 %s1604, %s1605
        %s1607 = smul.addr %s1606, 8
        %s1608 = scalar_lea.vmem %s3, %s1607
        // Predicated region
        $region37: #{soft_erosion.2} parent=27 // pred_check
          %p1609 = pneg %p100
        $region38: #{soft_erosion.2} parent=27 // pred_check_branch
          %1611 = sbr.rel (%p1609) target = $region40
        $region39: #{soft_erosion.2} parent=27 // pred_region
          _
        $region40: #{soft_erosion.2} parent=27 // pred_fallthru
          _
        // Predicated region
        $region41: #{soft_erosion.2} parent=27 // pred_check
          %p1612 = pneg %p128
        $region42: #{soft_erosion.2} parent=27 // pred_check_branch
          %1614 = sbr.rel (%p1612) target = $region44
        $region43: #{soft_erosion.2} parent=27 // pred_region
          _
        $region44: #{soft_erosion.2} parent=27 // pred_fallthru
          _
      $region28: #{soft_erosion.2} parent=5 // pred_fallthru
        _
      %p1615 = scmp.le.s32.totalorder 2, %s14
      // Predicated region
      $region45: #{soft_erosion.2} parent=5 // pred_check
        %p1616 = pneg %p1615
      $region46: #{soft_erosion.2} parent=5 // pred_check_branch
        %1618 = sbr.rel (%p1616) target = $region48
      $region47: #{soft_erosion.2} parent=5 // pred_region
        %s1619 = ssub.s32 %s14, 2
        // Predicated region
        $region49: #{soft_erosion.2} parent=47 // pred_check
          %p1620 = pneg %p106
        $region50: #{soft_erosion.2} parent=47 // pred_check_branch
          %1622 = sbr.rel (%p1620) target = $region52
        $region51: #{soft_erosion.2} parent=47 // pred_region
          %p1623 = scmp.lt.s32.totalorder %s25, 1
          %s1624 = scalar_select %p1623, %s25, 1
          %p1625 = scmp.lt.s32.totalorder %s26, 0
          %s1626 = scalar_select %p1625, %s26, 0
          %s1627 = smul.addr %s1626, 2
          %s1628 = smul.addr %s1624, 2
          %s1629 = sadd.s32 %s1627, %s1628
          %s1630 = smul.addr %s1629, 8
          %s1631 = scalar_lea.vmem %s2, %s1630
        $region52: #{soft_erosion.2} parent=47 // pred_fallthru
          _
        // Predicated region
        $region53: #{soft_erosion.2} parent=47 // pred_check
          %p1632 = pneg %p134
        $region54: #{soft_erosion.2} parent=47 // pred_check_branch
          %1634 = sbr.rel (%p1632) target = $region56
        $region55: #{soft_erosion.2} parent=47 // pred_region
          %p1635 = scmp.lt.s32.totalorder %s25, 1
          %s1636 = scalar_select %p1635, %s25, 1
          %p1637 = scmp.lt.s32.totalorder %s26, 0
          %s1638 = scalar_select %p1637, %s26, 0
          %s1639 = smul.addr %s1638, 2
          %s1640 = smul.addr %s1636, 2
          %s1641 = sadd.s32 %s1639, %s1640
          %s1642 = smul.addr %s1641, 8
          %s1643 = scalar_lea.vmem %s3, %s1642
        $region56: #{soft_erosion.2} parent=47 // pred_fallthru
          _
      $region48: #{soft_erosion.2} parent=5 // pred_fallthru
        _
    $region6: #{soft_erosion.2} parent=1 // loop_footer
      %s18 = sadd.s32 1, %s14
    $region7: #{soft_erosion.2} parent=1 // loop_footer_branch
      %13 = sbr.rel target = $region3
    $region8: #{soft_erosion.2} parent=1 // loop_exit
      _
    %1644 = vsyncpa [#allocation4], 1
    %s1645 = scalar_lea.sflag [#allocation4], 1
    %1646 = vsyncpa %s1645, 1
    %1647 = vsyncpa [#allocation6], 1

</llo_original>
